<compile_context>
chip_gen: v7x
topology: tpu7x:2x2x1
jax: 0.10.0
libtpu: 0.0.40
codegen_flags: <defaults>
</compile_context>

<pallas_src>
import functools

import numpy as np
import jax
import jax.numpy as jnp
from jax import lax
from jax.experimental import pallas as pl
from jax.experimental.pallas import tpu as pltpu


# ---------------------------------------------------------------------------
# Fused Pallas kernel (one batch element per grid step)
# ---------------------------------------------------------------------------

def _unet_up_fused_kernel(x2_ref, x1_ref, upop_ref, msk_ref,
                          wsep_ref, bsep_ref, w1a_ref, w1b_ref, b1_ref,
                          w2w_ref, b2_ref, out_ref, *, out_w):
    """x2:(1,C2,H*W)  x1:(1,C1,H2*W2)  upop:(H*W,H2*W2)  msk:(9,H2*W2)
    wsep:(Cout,9*C2) w1a:(Cout,9*C1) w1b/w2w:(Cout,9*Cout) biases:(Cout,1) f32
    out:(1,Cout,H2*W2)."""
    cdt = upop_ref.dtype                      # compute dtype (bf16 default)
    hw2 = out_ref.shape[-1]

    def mm(a, b):                             # MXU matmul, f32 accumulation
        return jnp.dot(a, b, preferred_element_type=jnp.float32)

    def conv3x3(x, w):
        # x: (C, HW2) in cdt; w: (Cout, 9*C) in cdt -> (Cout, HW2) f32.
        # Taps are built in VMEM by shifting the flattened map along the lane
        # axis and masking row-wrap / border positions with precomputed 0/1
        # masks; then one MXU matmul over the K = 9*C dimension.
        c = x.shape[0]
        zpad = jnp.zeros((c, out_w + 1), cdt)
        z = jnp.concatenate([zpad, x, zpad], axis=1)      # (C, HW2 + 2*(W2+1))
        taps = []
        for k in range(9):                                # static 3x3 taps
            dy, dx = k // 3 - 1, k % 3 - 1
            start = (out_w + 1) + dy * out_w + dx
            taps.append(z[:, start:start + hw2] * msk_ref[k:k + 1, :])
        patches = jnp.concatenate(taps, axis=0)           # (9*C, HW2) in VMEM
        return mm(w, patches)

    # 1) bilinear x2 upsample (align_corners=True) as one MXU matmul.
    up = mm(x2_ref[0].astype(cdt), upop_ref[...])                    # (C2,HW2) f32

    # 2) depthwise 3x3 + pointwise 1x1, folded into one (Cout, 9*C2) matmul.
    sep = conv3x3(up.astype(cdt), wsep_ref[...]) + bsep_ref[...]     # (Cout,HW2)

    # 3)+4) conv1 on concat([inputs1, sep]) WITHOUT materializing the concat,
    #        then ReLU: two matmuls accumulate into the same f32 value.
    y = (conv3x3(x1_ref[0].astype(cdt), w1a_ref[...])
         + conv3x3(sep.astype(cdt), w1b_ref[...])
         + b1_ref[...])
    y = jnp.maximum(y, 0.0)

    # 5) conv2 + ReLU.
    y = conv3x3(y.astype(cdt), w2w_ref[...]) + b2_ref[...]
    y = jnp.maximum(y, 0.0)

    out_ref[0] = y.astype(out_ref.dtype)


# ---------------------------------------------------------------------------
# Static (shape-only) helpers, evaluated with numpy at trace time
# ---------------------------------------------------------------------------

def _bilinear_matrix(out_size, in_size):
    # Row-interpolation matrix of F.interpolate(..., 'bilinear', align_corners=True).
    if in_size == 1:
        return np.ones((out_size, 1), np.float32)
    pos = np.arange(out_size, dtype=np.float64) * (in_size - 1) / (out_size - 1)
    lo = np.clip(np.floor(pos).astype(np.int64), 0, in_size - 2)
    frac = pos - lo
    m = np.zeros((out_size, in_size), np.float64)
    m[np.arange(out_size), lo] += 1.0 - frac
    m[np.arange(out_size), lo + 1] += frac
    return m.astype(np.float32)


def _tap_masks(h, w):
    # mask[k, p*w+q] = 1 iff the (dy,dx) shifted position is inside the image.
    m = np.zeros((9, h, w), np.float32)
    for k in range(9):
        dy, dx = k // 3 - 1, k % 3 - 1
        m[k, max(0, -dy):h - max(0, dy), max(0, -dx):w - max(0, dx)] = 1.0
    return m.reshape(9, h * w)


def _conv_w_2d(w):
    # (Cout, Cin, 3, 3) -> (Cout, 9*Cin), K ordered tap-major (ky, kx, cin)
    # to match the in-kernel tap stacking.
    cout, cin = w.shape[0], w.shape[1]
    return jnp.transpose(w, (0, 2, 3, 1)).reshape(cout, 9 * cin)


# ---------------------------------------------------------------------------
# Forward wrapper
# ---------------------------------------------------------------------------

@functools.partial(jax.jit, static_argnames=("compute_dtype",))
def unet_up_forward(inputs1, inputs2, params, compute_dtype=jnp.bfloat16):
    n, c2, h, w = inputs2.shape
    _, c1, h2, w2 = inputs1.shape
    assert (h2, w2) == (2 * h, 2 * w)
    cout = params["pw_w"].shape[0]
    hw, hw2 = h * w, h2 * w2
    cdt = compute_dtype

    # Bilinear x2 upsample operator (align_corners=True): up_flat = x_flat @ M^T.
    a = _bilinear_matrix(h2, h)                               # (H2, H)
    b = _bilinear_matrix(w2, w)                               # (W2, W)
    upop = jnp.asarray(np.kron(a, b).T, cdt)                  # (H*W, H2*W2)
    msk = jnp.asarray(_tap_masks(h2, w2), cdt)                # (9, H2*W2)

    # Fold depthwise (C2,1,3,3) + pointwise (Cout,C2,1,1) into one MXU weight.
    dw = params["dw_w"].reshape(c2, 9)                        # k = ky*3 + kx
    pw = params["pw_w"].reshape(cout, c2)
    wsep = (pw[:, None, :] * jnp.transpose(dw)[None, :, :]).reshape(cout, 9 * c2)
    bsep = (params["pw_b"] + pw @ params["dw_b"]).reshape(cout, 1).astype(jnp.float32)

    # conv1 split into its inputs1 half and its sep half (concat-free conv1).
    w1a = _conv_w_2d(params["w1"][:, :c1])                    # (Cout, 9*C1)
    w1b = _conv_w_2d(params["w1"][:, c1:])                    # (Cout, 9*Cout)
    w2w = _conv_w_2d(params["w2"])                            # (Cout, 9*Cout)
    b1 = params["b1"].reshape(cout, 1).astype(jnp.float32)
    b2 = params["b2"].reshape(cout, 1).astype(jnp.float32)

    x2 = inputs2.reshape(n, c2, hw)
    x1 = inputs1.reshape(n, c1, hw2)

    kernel = functools.partial(_unet_up_fused_kernel, out_w=w2)

    out = pl.pallas_call(
        kernel,
        out_shape=jax.ShapeDtypeStruct((n, cout, hw2), inputs1.dtype),
        grid=(n,),
        in_specs=[
            pl.BlockSpec((1, c2, hw), lambda i: (i, 0, 0)),        # inputs2
            pl.BlockSpec((1, c1, hw2), lambda i: (i, 0, 0)),       # inputs1
            pl.BlockSpec((hw, hw2), lambda i: (0, 0)),             # upsample op
            pl.BlockSpec((9, hw2), lambda i: (0, 0)),              # tap masks
            pl.BlockSpec((cout, 9 * c2), lambda i: (0, 0)),        # wsep
            pl.BlockSpec((cout, 1), lambda i: (0, 0)),             # bsep
            pl.BlockSpec((cout, 9 * c1), lambda i: (0, 0)),        # w1a
            pl.BlockSpec((cout, 9 * cout), lambda i: (0, 0)),      # w1b
            pl.BlockSpec((cout, 1), lambda i: (0, 0)),             # b1
            pl.BlockSpec((cout, 9 * cout), lambda i: (0, 0)),      # w2
            pl.BlockSpec((cout, 1), lambda i: (0, 0)),             # b2
        ],
        out_specs=pl.BlockSpec((1, cout, hw2), lambda i: (i, 0, 0)),
        compiler_params=pltpu.CompilerParams(
            dimension_semantics=("parallel",),
            vmem_limit_bytes=48 * 1024 * 1024),
    )(x2, x1, upop, msk,
      wsep.astype(cdt), bsep, w1a.astype(cdt), w1b.astype(cdt), b1,
      w2w.astype(cdt), b2)

    return out.reshape(n, cout, h2, w2)


# ---------------------------------------------------------------------------
# Pure-JAX reference (correctness check only)
# ---------------------------------------------------------------------------

def ref_forward(inputs1, inputs2, params):
    n, c2, h, w = inputs2.shape
    h2, w2 = 2 * h, 2 * w
    a = jnp.asarray(_bilinear_matrix(h2, h))
    b = jnp.asarray(_bilinear_matrix(w2, w))
    dn = ("NCHW", "OIHW", "NCHW")

    up = jnp.einsum("ph,nchw->ncpw", a, inputs2)
    up = jnp.einsum("ncpw,qw->ncpq", up, b)
    x = lax.conv_general_dilated(up, params["dw_w"], (1, 1), ((1, 1), (1, 1)),
                                 feature_group_count=c2, dimension_numbers=dn)
    x = x + params["dw_b"][None, :, None, None]
    x = lax.conv_general_dilated(x, params["pw_w"], (1, 1), ((0, 0), (0, 0)),
                                 dimension_numbers=dn)
    x = x + params["pw_b"][None, :, None, None]
    x = jnp.concatenate([inputs1, x], axis=1)
    x = lax.conv_general_dilated(x, params["w1"], (1, 1), ((1, 1), (1, 1)),
                                 dimension_numbers=dn)
    x = jnp.maximum(x + params["b1"][None, :, None, None], 0.0)
    x = lax.conv_general_dilated(x, params["w2"], (1, 1), ((1, 1), (1, 1)),
                                 dimension_numbers=dn)
    x = jnp.maximum(x + params["b2"][None, :, None, None], 0.0)
    return x


if __name__ == "__main__":
    n, c1, c2, cout = 2, 4, 4, 4          # in_size = c2 = 4, out_size = cout = 4
    h, w = 8, 8                           # inputs2 spatial; inputs1 is 2x (16x16)
    h2, w2 = 2 * h, 2 * w

    key = jax.random.PRNGKey(0)
    ks = jax.random.split(key, 10)
    inputs1 = jax.random.normal(ks[0], (n, c1, h2, w2), jnp.float32)
    inputs2 = jax.random.normal(ks[1], (n, c2, h, w), jnp.float32)

    params = dict(
        dw_w=0.2 * jax.random.normal(ks[2], (c2, 1, 3, 3), jnp.float32),
        dw_b=0.1 * jax.random.normal(ks[3], (c2,), jnp.float32),
        pw_w=0.2 * jax.random.normal(ks[4], (cout, c2, 1, 1), jnp.float32),
        pw_b=0.1 * jax.random.normal(ks[5], (cout,), jnp.float32),
        # TODO(synk): original __init__ declares conv1 = Conv2d(out_size, out_size, 3),
        # which only type-checks if inputs1 has 0 channels; we use the concatenated
        # channel count (c1 + out_size) so the skip connection is meaningful.
        w1=0.2 * jax.random.normal(ks[6], (cout, c1 + cout, 3, 3), jnp.float32),
        b1=0.1 * jax.random.normal(ks[7], (cout,), jnp.float32),
        w2=0.2 * jax.random.normal(ks[8], (cout, cout, 3, 3), jnp.float32),
        b2=0.1 * jax.random.normal(ks[9], (cout,), jnp.float32),
    )

    # Fast path (default): bf16 MXU matmuls with f32 accumulation.
    out_bf16 = jax.block_until_ready(unet_up_forward(inputs1, inputs2, params))
    assert out_bf16.shape == (n, cout, h2, w2), out_bf16.shape

    # f32-compute variant for a tight numerics check of the fused structure.
    out_f32 = jax.block_until_ready(
        unet_up_forward(inputs1, inputs2, params, compute_dtype=jnp.float32))

    ref = jax.block_until_ready(ref_forward(inputs1, inputs2, params))
    np.testing.assert_allclose(np.asarray(out_f32), np.asarray(ref),
                               atol=2e-4, rtol=2e-4)
    np.testing.assert_allclose(np.asarray(out_bf16), np.asarray(ref),
                               atol=2e-1, rtol=1e-1)

    print("KERNEL_OK")
</pallas_src>

<mosaic_0001>
module attributes {stable_mosaic.version = 11 : i64} {
  func.func @_unet_up_fused_kernel(%arg0: i32, %arg1: memref<1x4x64xf32, #tpu.memory_space<vmem>>, %arg2: memref<1x4x256xf32, #tpu.memory_space<vmem>>, %arg3: memref<64x256xbf16, #tpu.memory_space<vmem>>, %arg4: memref<9x256xbf16, #tpu.memory_space<vmem>>, %arg5: memref<4x36xbf16, #tpu.memory_space<vmem>>, %arg6: memref<4x1xf32, #tpu.memory_space<vmem>>, %arg7: memref<4x36xbf16, #tpu.memory_space<vmem>>, %arg8: memref<4x36xbf16, #tpu.memory_space<vmem>>, %arg9: memref<4x1xf32, #tpu.memory_space<vmem>>, %arg10: memref<4x36xbf16, #tpu.memory_space<vmem>>, %arg11: memref<4x1xf32, #tpu.memory_space<vmem>>, %arg12: memref<1x4x256xf32, #tpu.memory_space<vmem>>) attributes {dimension_semantics = [#tpu.dimension_semantics<parallel>], iteration_bounds = array<i64: 2>, scalar_prefetch = 0 : i64, scratch_operands = 0 : i64, tpu.core_type = #tpu.core_type<tc>, window_params = [{transform_indices = @transform_0, window_bounds = array<i64: 1, 4, 64>}, {transform_indices = @transform_1, window_bounds = array<i64: 1, 4, 256>}, {pipeline_mode = #tpu.pipeline_mode<synchronous>, transform_indices = @transform_2, window_bounds = array<i64: 64, 256>}, {pipeline_mode = #tpu.pipeline_mode<synchronous>, transform_indices = @transform_3, window_bounds = array<i64: 9, 256>}, {pipeline_mode = #tpu.pipeline_mode<synchronous>, transform_indices = @transform_4, window_bounds = array<i64: 4, 36>}, {pipeline_mode = #tpu.pipeline_mode<synchronous>, transform_indices = @transform_5, window_bounds = array<i64: 4, 1>}, {pipeline_mode = #tpu.pipeline_mode<synchronous>, transform_indices = @transform_6, window_bounds = array<i64: 4, 36>}, {pipeline_mode = #tpu.pipeline_mode<synchronous>, transform_indices = @transform_7, window_bounds = array<i64: 4, 36>}, {pipeline_mode = #tpu.pipeline_mode<synchronous>, transform_indices = @transform_8, window_bounds = array<i64: 4, 1>}, {pipeline_mode = #tpu.pipeline_mode<synchronous>, transform_indices = @transform_9, window_bounds = array<i64: 4, 36>}, {pipeline_mode = #tpu.pipeline_mode<synchronous>, transform_indices = @transform_10, window_bounds = array<i64: 4, 1>}, {transform_indices = @transform_11, window_bounds = array<i64: 1, 4, 256>}]} {
    %c0 = arith.constant 0 : index
    %c0_0 = arith.constant 0 : index
    %c0_1 = arith.constant 0 : index
    %0 = vector.load %arg1[%c0, %c0_0, %c0_1] : memref<1x4x64xf32, #tpu.memory_space<vmem>>, vector<1x4x64xf32>
    %1 = vector.shape_cast %0 : vector<1x4x64xf32> to vector<4x64xf32>
    %2 = arith.truncf %1 : vector<4x64xf32> to vector<4x64xbf16>
    %c0_2 = arith.constant 0 : index
    %c0_3 = arith.constant 0 : index
    %3 = vector.load %arg3[%c0_2, %c0_3] : memref<64x256xbf16, #tpu.memory_space<vmem>>, vector<64x256xbf16>
    %cst = arith.constant dense<0.000000e+00> : vector<4x256xf32>
    %4 = tpu.matmul %2, %3, %cst {dimension_numbers = #tpu.dot_dimension_numbers<[1], [0], [0], [1], [0, 0, 1, 1], [], []>} : vector<4x64xbf16>, vector<64x256xbf16>, vector<4x256xf32> -> vector<4x256xf32>
    %5 = arith.truncf %4 : vector<4x256xf32> to vector<4x256xbf16>
    %c0_4 = arith.constant 0 : index
    %c0_5 = arith.constant 0 : index
    %6 = vector.load %arg5[%c0_4, %c0_5] : memref<4x36xbf16, #tpu.memory_space<vmem>>, vector<4x36xbf16>
    %cst_6 = arith.constant 0.000000e+00 : bf16
    %7 = vector.broadcast %cst_6 : bf16 to vector<4x17xbf16>
    %8 = tpu.concatenate %7, %5, %7 in 1 : vector<4x17xbf16>, vector<4x256xbf16>, vector<4x17xbf16> -> vector<4x290xbf16>
    %9 = vector.extract_strided_slice %8 {offsets = [0, 0], sizes = [4, 256], strides = [1, 1]} : vector<4x290xbf16> to vector<4x256xbf16>
    %c0_7 = arith.constant 0 : index
    %c0_8 = arith.constant 0 : index
    %10 = vector.load %arg4[%c0_7, %c0_8] : memref<9x256xbf16, #tpu.memory_space<vmem>>, vector<1x256xbf16>
    %11 = vector.broadcast %10 : vector<1x256xbf16> to vector<4x256xbf16>
    %12 = arith.mulf %9, %11 : vector<4x256xbf16>
    %13 = vector.extract_strided_slice %8 {offsets = [0, 1], sizes = [4, 256], strides = [1, 1]} : vector<4x290xbf16> to vector<4x256xbf16>
    %c1 = arith.constant 1 : index
    %c0_9 = arith.constant 0 : index
    %14 = vector.load %arg4[%c1, %c0_9] : memref<9x256xbf16, #tpu.memory_space<vmem>>, vector<1x256xbf16>
    %15 = vector.broadcast %14 : vector<1x256xbf16> to vector<4x256xbf16>
    %16 = arith.mulf %13, %15 : vector<4x256xbf16>
    %17 = vector.extract_strided_slice %8 {offsets = [0, 2], sizes = [4, 256], strides = [1, 1]} : vector<4x290xbf16> to vector<4x256xbf16>
    %c2 = arith.constant 2 : index
    %c0_10 = arith.constant 0 : index
    %18 = vector.load %arg4[%c2, %c0_10] : memref<9x256xbf16, #tpu.memory_space<vmem>>, vector<1x256xbf16>
    %19 = vector.broadcast %18 : vector<1x256xbf16> to vector<4x256xbf16>
    %20 = arith.mulf %17, %19 : vector<4x256xbf16>
    %21 = vector.extract_strided_slice %8 {offsets = [0, 16], sizes = [4, 256], strides = [1, 1]} : vector<4x290xbf16> to vector<4x256xbf16>
    %c3 = arith.constant 3 : index
    %c0_11 = arith.constant 0 : index
    %22 = vector.load %arg4[%c3, %c0_11] : memref<9x256xbf16, #tpu.memory_space<vmem>>, vector<1x256xbf16>
    %23 = vector.broadcast %22 : vector<1x256xbf16> to vector<4x256xbf16>
    %24 = arith.mulf %21, %23 : vector<4x256xbf16>
    %25 = vector.extract_strided_slice %8 {offsets = [0, 17], sizes = [4, 256], strides = [1, 1]} : vector<4x290xbf16> to vector<4x256xbf16>
    %c4 = arith.constant 4 : index
    %c0_12 = arith.constant 0 : index
    %26 = vector.load %arg4[%c4, %c0_12] : memref<9x256xbf16, #tpu.memory_space<vmem>>, vector<1x256xbf16>
    %27 = vector.broadcast %26 : vector<1x256xbf16> to vector<4x256xbf16>
    %28 = arith.mulf %25, %27 : vector<4x256xbf16>
    %29 = vector.extract_strided_slice %8 {offsets = [0, 18], sizes = [4, 256], strides = [1, 1]} : vector<4x290xbf16> to vector<4x256xbf16>
    %c5 = arith.constant 5 : index
    %c0_13 = arith.constant 0 : index
    %30 = vector.load %arg4[%c5, %c0_13] : memref<9x256xbf16, #tpu.memory_space<vmem>>, vector<1x256xbf16>
    %31 = vector.broadcast %30 : vector<1x256xbf16> to vector<4x256xbf16>
    %32 = arith.mulf %29, %31 : vector<4x256xbf16>
    %33 = vector.extract_strided_slice %8 {offsets = [0, 32], sizes = [4, 256], strides = [1, 1]} : vector<4x290xbf16> to vector<4x256xbf16>
    %c6 = arith.constant 6 : index
    %c0_14 = arith.constant 0 : index
    %34 = vector.load %arg4[%c6, %c0_14] : memref<9x256xbf16, #tpu.memory_space<vmem>>, vector<1x256xbf16>
    %35 = vector.broadcast %34 : vector<1x256xbf16> to vector<4x256xbf16>
    %36 = arith.mulf %33, %35 : vector<4x256xbf16>
    %37 = vector.extract_strided_slice %8 {offsets = [0, 33], sizes = [4, 256], strides = [1, 1]} : vector<4x290xbf16> to vector<4x256xbf16>
    %c7 = arith.constant 7 : index
    %c0_15 = arith.constant 0 : index
    %38 = vector.load %arg4[%c7, %c0_15] : memref<9x256xbf16, #tpu.memory_space<vmem>>, vector<1x256xbf16>
    %39 = vector.broadcast %38 : vector<1x256xbf16> to vector<4x256xbf16>
    %40 = arith.mulf %37, %39 : vector<4x256xbf16>
    %41 = vector.extract_strided_slice %8 {offsets = [0, 34], sizes = [4, 256], strides = [1, 1]} : vector<4x290xbf16> to vector<4x256xbf16>
    %c8 = arith.constant 8 : index
    %c0_16 = arith.constant 0 : index
    %42 = vector.load %arg4[%c8, %c0_16] : memref<9x256xbf16, #tpu.memory_space<vmem>>, vector<1x256xbf16>
    %43 = vector.broadcast %42 : vector<1x256xbf16> to vector<4x256xbf16>
    %44 = arith.mulf %41, %43 : vector<4x256xbf16>
    %45 = tpu.concatenate %12, %16, %20, %24, %28, %32, %36, %40, %44 in 0 : vector<4x256xbf16>, vector<4x256xbf16>, vector<4x256xbf16>, vector<4x256xbf16>, vector<4x256xbf16>, vector<4x256xbf16>, vector<4x256xbf16>, vector<4x256xbf16>, vector<4x256xbf16> -> vector<36x256xbf16>
    %cst_17 = arith.constant dense<0.000000e+00> : vector<4x256xf32>
    %46 = tpu.matmul %6, %45, %cst_17 {dimension_numbers = #tpu.dot_dimension_numbers<[1], [0], [0], [1], [0, 0, 1, 1], [], []>} : vector<4x36xbf16>, vector<36x256xbf16>, vector<4x256xf32> -> vector<4x256xf32>
    %c0_18 = arith.constant 0 : index
    %c0_19 = arith.constant 0 : index
    %47 = vector.load %arg6[%c0_18, %c0_19] : memref<4x1xf32, #tpu.memory_space<vmem>>, vector<4x1xf32>
    %48 = vector.broadcast %47 : vector<4x1xf32> to vector<4x256xf32>
    %49 = arith.addf %46, %48 : vector<4x256xf32>
    %c0_20 = arith.constant 0 : index
    %c0_21 = arith.constant 0 : index
    %c0_22 = arith.constant 0 : index
    %50 = vector.load %arg2[%c0_20, %c0_21, %c0_22] : memref<1x4x256xf32, #tpu.memory_space<vmem>>, vector<1x4x256xf32>
    %51 = vector.shape_cast %50 : vector<1x4x256xf32> to vector<4x256xf32>
    %52 = arith.truncf %51 : vector<4x256xf32> to vector<4x256xbf16>
    %c0_23 = arith.constant 0 : index
    %c0_24 = arith.constant 0 : index
    %53 = vector.load %arg7[%c0_23, %c0_24] : memref<4x36xbf16, #tpu.memory_space<vmem>>, vector<4x36xbf16>
    %cst_25 = arith.constant 0.000000e+00 : bf16
    %54 = vector.broadcast %cst_25 : bf16 to vector<4x17xbf16>
    %55 = tpu.concatenate %54, %52, %54 in 1 : vector<4x17xbf16>, vector<4x256xbf16>, vector<4x17xbf16> -> vector<4x290xbf16>
    %56 = vector.extract_strided_slice %55 {offsets = [0, 0], sizes = [4, 256], strides = [1, 1]} : vector<4x290xbf16> to vector<4x256xbf16>
    %c0_26 = arith.constant 0 : index
    %c0_27 = arith.constant 0 : index
    %57 = vector.load %arg4[%c0_26, %c0_27] : memref<9x256xbf16, #tpu.memory_space<vmem>>, vector<1x256xbf16>
    %58 = vector.broadcast %57 : vector<1x256xbf16> to vector<4x256xbf16>
    %59 = arith.mulf %56, %58 : vector<4x256xbf16>
    %60 = vector.extract_strided_slice %55 {offsets = [0, 1], sizes = [4, 256], strides = [1, 1]} : vector<4x290xbf16> to vector<4x256xbf16>
    %c1_28 = arith.constant 1 : index
    %c0_29 = arith.constant 0 : index
    %61 = vector.load %arg4[%c1_28, %c0_29] : memref<9x256xbf16, #tpu.memory_space<vmem>>, vector<1x256xbf16>
    %62 = vector.broadcast %61 : vector<1x256xbf16> to vector<4x256xbf16>
    %63 = arith.mulf %60, %62 : vector<4x256xbf16>
    %64 = vector.extract_strided_slice %55 {offsets = [0, 2], sizes = [4, 256], strides = [1, 1]} : vector<4x290xbf16> to vector<4x256xbf16>
    %c2_30 = arith.constant 2 : index
    %c0_31 = arith.constant 0 : index
    %65 = vector.load %arg4[%c2_30, %c0_31] : memref<9x256xbf16, #tpu.memory_space<vmem>>, vector<1x256xbf16>
    %66 = vector.broadcast %65 : vector<1x256xbf16> to vector<4x256xbf16>
    %67 = arith.mulf %64, %66 : vector<4x256xbf16>
    %68 = vector.extract_strided_slice %55 {offsets = [0, 16], sizes = [4, 256], strides = [1, 1]} : vector<4x290xbf16> to vector<4x256xbf16>
    %c3_32 = arith.constant 3 : index
    %c0_33 = arith.constant 0 : index
    %69 = vector.load %arg4[%c3_32, %c0_33] : memref<9x256xbf16, #tpu.memory_space<vmem>>, vector<1x256xbf16>
    %70 = vector.broadcast %69 : vector<1x256xbf16> to vector<4x256xbf16>
    %71 = arith.mulf %68, %70 : vector<4x256xbf16>
    %72 = vector.extract_strided_slice %55 {offsets = [0, 17], sizes = [4, 256], strides = [1, 1]} : vector<4x290xbf16> to vector<4x256xbf16>
    %c4_34 = arith.constant 4 : index
    %c0_35 = arith.constant 0 : index
    %73 = vector.load %arg4[%c4_34, %c0_35] : memref<9x256xbf16, #tpu.memory_space<vmem>>, vector<1x256xbf16>
    %74 = vector.broadcast %73 : vector<1x256xbf16> to vector<4x256xbf16>
    %75 = arith.mulf %72, %74 : vector<4x256xbf16>
    %76 = vector.extract_strided_slice %55 {offsets = [0, 18], sizes = [4, 256], strides = [1, 1]} : vector<4x290xbf16> to vector<4x256xbf16>
    %c5_36 = arith.constant 5 : index
    %c0_37 = arith.constant 0 : index
    %77 = vector.load %arg4[%c5_36, %c0_37] : memref<9x256xbf16, #tpu.memory_space<vmem>>, vector<1x256xbf16>
    %78 = vector.broadcast %77 : vector<1x256xbf16> to vector<4x256xbf16>
    %79 = arith.mulf %76, %78 : vector<4x256xbf16>
    %80 = vector.extract_strided_slice %55 {offsets = [0, 32], sizes = [4, 256], strides = [1, 1]} : vector<4x290xbf16> to vector<4x256xbf16>
    %c6_38 = arith.constant 6 : index
    %c0_39 = arith.constant 0 : index
    %81 = vector.load %arg4[%c6_38, %c0_39] : memref<9x256xbf16, #tpu.memory_space<vmem>>, vector<1x256xbf16>
    %82 = vector.broadcast %81 : vector<1x256xbf16> to vector<4x256xbf16>
    %83 = arith.mulf %80, %82 : vector<4x256xbf16>
    %84 = vector.extract_strided_slice %55 {offsets = [0, 33], sizes = [4, 256], strides = [1, 1]} : vector<4x290xbf16> to vector<4x256xbf16>
    %c7_40 = arith.constant 7 : index
    %c0_41 = arith.constant 0 : index
    %85 = vector.load %arg4[%c7_40, %c0_41] : memref<9x256xbf16, #tpu.memory_space<vmem>>, vector<1x256xbf16>
    %86 = vector.broadcast %85 : vector<1x256xbf16> to vector<4x256xbf16>
    %87 = arith.mulf %84, %86 : vector<4x256xbf16>
    %88 = vector.extract_strided_slice %55 {offsets = [0, 34], sizes = [4, 256], strides = [1, 1]} : vector<4x290xbf16> to vector<4x256xbf16>
    %c8_42 = arith.constant 8 : index
    %c0_43 = arith.constant 0 : index
    %89 = vector.load %arg4[%c8_42, %c0_43] : memref<9x256xbf16, #tpu.memory_space<vmem>>, vector<1x256xbf16>
    %90 = vector.broadcast %89 : vector<1x256xbf16> to vector<4x256xbf16>
    %91 = arith.mulf %88, %90 : vector<4x256xbf16>
    %92 = tpu.concatenate %59, %63, %67, %71, %75, %79, %83, %87, %91 in 0 : vector<4x256xbf16>, vector<4x256xbf16>, vector<4x256xbf16>, vector<4x256xbf16>, vector<4x256xbf16>, vector<4x256xbf16>, vector<4x256xbf16>, vector<4x256xbf16>, vector<4x256xbf16> -> vector<36x256xbf16>
    %cst_44 = arith.constant dense<0.000000e+00> : vector<4x256xf32>
    %93 = tpu.matmul %53, %92, %cst_44 {dimension_numbers = #tpu.dot_dimension_numbers<[1], [0], [0], [1], [0, 0, 1, 1], [], []>} : vector<4x36xbf16>, vector<36x256xbf16>, vector<4x256xf32> -> vector<4x256xf32>
    %94 = arith.truncf %49 : vector<4x256xf32> to vector<4x256xbf16>
    %c0_45 = arith.constant 0 : index
    %c0_46 = arith.constant 0 : index
    %95 = vector.load %arg8[%c0_45, %c0_46] : memref<4x36xbf16, #tpu.memory_space<vmem>>, vector<4x36xbf16>
    %cst_47 = arith.constant 0.000000e+00 : bf16
    %96 = vector.broadcast %cst_47 : bf16 to vector<4x17xbf16>
    %97 = tpu.concatenate %96, %94, %96 in 1 : vector<4x17xbf16>, vector<4x256xbf16>, vector<4x17xbf16> -> vector<4x290xbf16>
    %98 = vector.extract_strided_slice %97 {offsets = [0, 0], sizes = [4, 256], strides = [1, 1]} : vector<4x290xbf16> to vector<4x256xbf16>
    %c0_48 = arith.constant 0 : index
    %c0_49 = arith.constant 0 : index
    %99 = vector.load %arg4[%c0_48, %c0_49] : memref<9x256xbf16, #tpu.memory_space<vmem>>, vector<1x256xbf16>
    %100 = vector.broadcast %99 : vector<1x256xbf16> to vector<4x256xbf16>
    %101 = arith.mulf %98, %100 : vector<4x256xbf16>
    %102 = vector.extract_strided_slice %97 {offsets = [0, 1], sizes = [4, 256], strides = [1, 1]} : vector<4x290xbf16> to vector<4x256xbf16>
    %c1_50 = arith.constant 1 : index
    %c0_51 = arith.constant 0 : index
    %103 = vector.load %arg4[%c1_50, %c0_51] : memref<9x256xbf16, #tpu.memory_space<vmem>>, vector<1x256xbf16>
    %104 = vector.broadcast %103 : vector<1x256xbf16> to vector<4x256xbf16>
    %105 = arith.mulf %102, %104 : vector<4x256xbf16>
    %106 = vector.extract_strided_slice %97 {offsets = [0, 2], sizes = [4, 256], strides = [1, 1]} : vector<4x290xbf16> to vector<4x256xbf16>
    %c2_52 = arith.constant 2 : index
    %c0_53 = arith.constant 0 : index
    %107 = vector.load %arg4[%c2_52, %c0_53] : memref<9x256xbf16, #tpu.memory_space<vmem>>, vector<1x256xbf16>
    %108 = vector.broadcast %107 : vector<1x256xbf16> to vector<4x256xbf16>
    %109 = arith.mulf %106, %108 : vector<4x256xbf16>
    %110 = vector.extract_strided_slice %97 {offsets = [0, 16], sizes = [4, 256], strides = [1, 1]} : vector<4x290xbf16> to vector<4x256xbf16>
    %c3_54 = arith.constant 3 : index
    %c0_55 = arith.constant 0 : index
    %111 = vector.load %arg4[%c3_54, %c0_55] : memref<9x256xbf16, #tpu.memory_space<vmem>>, vector<1x256xbf16>
    %112 = vector.broadcast %111 : vector<1x256xbf16> to vector<4x256xbf16>
    %113 = arith.mulf %110, %112 : vector<4x256xbf16>
    %114 = vector.extract_strided_slice %97 {offsets = [0, 17], sizes = [4, 256], strides = [1, 1]} : vector<4x290xbf16> to vector<4x256xbf16>
    %c4_56 = arith.constant 4 : index
    %c0_57 = arith.constant 0 : index
    %115 = vector.load %arg4[%c4_56, %c0_57] : memref<9x256xbf16, #tpu.memory_space<vmem>>, vector<1x256xbf16>
    %116 = vector.broadcast %115 : vector<1x256xbf16> to vector<4x256xbf16>
    %117 = arith.mulf %114, %116 : vector<4x256xbf16>
    %118 = vector.extract_strided_slice %97 {offsets = [0, 18], sizes = [4, 256], strides = [1, 1]} : vector<4x290xbf16> to vector<4x256xbf16>
    %c5_58 = arith.constant 5 : index
    %c0_59 = arith.constant 0 : index
    %119 = vector.load %arg4[%c5_58, %c0_59] : memref<9x256xbf16, #tpu.memory_space<vmem>>, vector<1x256xbf16>
    %120 = vector.broadcast %119 : vector<1x256xbf16> to vector<4x256xbf16>
    %121 = arith.mulf %118, %120 : vector<4x256xbf16>
    %122 = vector.extract_strided_slice %97 {offsets = [0, 32], sizes = [4, 256], strides = [1, 1]} : vector<4x290xbf16> to vector<4x256xbf16>
    %c6_60 = arith.constant 6 : index
    %c0_61 = arith.constant 0 : index
    %123 = vector.load %arg4[%c6_60, %c0_61] : memref<9x256xbf16, #tpu.memory_space<vmem>>, vector<1x256xbf16>
    %124 = vector.broadcast %123 : vector<1x256xbf16> to vector<4x256xbf16>
    %125 = arith.mulf %122, %124 : vector<4x256xbf16>
    %126 = vector.extract_strided_slice %97 {offsets = [0, 33], sizes = [4, 256], strides = [1, 1]} : vector<4x290xbf16> to vector<4x256xbf16>
    %c7_62 = arith.constant 7 : index
    %c0_63 = arith.constant 0 : index
    %127 = vector.load %arg4[%c7_62, %c0_63] : memref<9x256xbf16, #tpu.memory_space<vmem>>, vector<1x256xbf16>
    %128 = vector.broadcast %127 : vector<1x256xbf16> to vector<4x256xbf16>
    %129 = arith.mulf %126, %128 : vector<4x256xbf16>
    %130 = vector.extract_strided_slice %97 {offsets = [0, 34], sizes = [4, 256], strides = [1, 1]} : vector<4x290xbf16> to vector<4x256xbf16>
    %c8_64 = arith.constant 8 : index
    %c0_65 = arith.constant 0 : index
    %131 = vector.load %arg4[%c8_64, %c0_65] : memref<9x256xbf16, #tpu.memory_space<vmem>>, vector<1x256xbf16>
    %132 = vector.broadcast %131 : vector<1x256xbf16> to vector<4x256xbf16>
    %133 = arith.mulf %130, %132 : vector<4x256xbf16>
    %134 = tpu.concatenate %101, %105, %109, %113, %117, %121, %125, %129, %133 in 0 : vector<4x256xbf16>, vector<4x256xbf16>, vector<4x256xbf16>, vector<4x256xbf16>, vector<4x256xbf16>, vector<4x256xbf16>, vector<4x256xbf16>, vector<4x256xbf16>, vector<4x256xbf16> -> vector<36x256xbf16>
    %cst_66 = arith.constant dense<0.000000e+00> : vector<4x256xf32>
    %135 = tpu.matmul %95, %134, %cst_66 {dimension_numbers = #tpu.dot_dimension_numbers<[1], [0], [0], [1], [0, 0, 1, 1], [], []>} : vector<4x36xbf16>, vector<36x256xbf16>, vector<4x256xf32> -> vector<4x256xf32>
    %136 = arith.addf %93, %135 : vector<4x256xf32>
    %c0_67 = arith.constant 0 : index
    %c0_68 = arith.constant 0 : index
    %137 = vector.load %arg9[%c0_67, %c0_68] : memref<4x1xf32, #tpu.memory_space<vmem>>, vector<4x1xf32>
    %138 = vector.broadcast %137 : vector<4x1xf32> to vector<4x256xf32>
    %139 = arith.addf %136, %138 : vector<4x256xf32>
    %cst_69 = arith.constant 0.000000e+00 : f32
    %140 = vector.broadcast %cst_69 : f32 to vector<4x256xf32>
    %141 = arith.maximumf %139, %140 : vector<4x256xf32>
    %142 = arith.truncf %141 : vector<4x256xf32> to vector<4x256xbf16>
    %c0_70 = arith.constant 0 : index
    %c0_71 = arith.constant 0 : index
    %143 = vector.load %arg10[%c0_70, %c0_71] : memref<4x36xbf16, #tpu.memory_space<vmem>>, vector<4x36xbf16>
    %cst_72 = arith.constant 0.000000e+00 : bf16
    %144 = vector.broadcast %cst_72 : bf16 to vector<4x17xbf16>
    %145 = tpu.concatenate %144, %142, %144 in 1 : vector<4x17xbf16>, vector<4x256xbf16>, vector<4x17xbf16> -> vector<4x290xbf16>
    %146 = vector.extract_strided_slice %145 {offsets = [0, 0], sizes = [4, 256], strides = [1, 1]} : vector<4x290xbf16> to vector<4x256xbf16>
    %c0_73 = arith.constant 0 : index
    %c0_74 = arith.constant 0 : index
    %147 = vector.load %arg4[%c0_73, %c0_74] : memref<9x256xbf16, #tpu.memory_space<vmem>>, vector<1x256xbf16>
    %148 = vector.broadcast %147 : vector<1x256xbf16> to vector<4x256xbf16>
    %149 = arith.mulf %146, %148 : vector<4x256xbf16>
    %150 = vector.extract_strided_slice %145 {offsets = [0, 1], sizes = [4, 256], strides = [1, 1]} : vector<4x290xbf16> to vector<4x256xbf16>
    %c1_75 = arith.constant 1 : index
    %c0_76 = arith.constant 0 : index
    %151 = vector.load %arg4[%c1_75, %c0_76] : memref<9x256xbf16, #tpu.memory_space<vmem>>, vector<1x256xbf16>
    %152 = vector.broadcast %151 : vector<1x256xbf16> to vector<4x256xbf16>
    %153 = arith.mulf %150, %152 : vector<4x256xbf16>
    %154 = vector.extract_strided_slice %145 {offsets = [0, 2], sizes = [4, 256], strides = [1, 1]} : vector<4x290xbf16> to vector<4x256xbf16>
    %c2_77 = arith.constant 2 : index
    %c0_78 = arith.constant 0 : index
    %155 = vector.load %arg4[%c2_77, %c0_78] : memref<9x256xbf16, #tpu.memory_space<vmem>>, vector<1x256xbf16>
    %156 = vector.broadcast %155 : vector<1x256xbf16> to vector<4x256xbf16>
    %157 = arith.mulf %154, %156 : vector<4x256xbf16>
    %158 = vector.extract_strided_slice %145 {offsets = [0, 16], sizes = [4, 256], strides = [1, 1]} : vector<4x290xbf16> to vector<4x256xbf16>
    %c3_79 = arith.constant 3 : index
    %c0_80 = arith.constant 0 : index
    %159 = vector.load %arg4[%c3_79, %c0_80] : memref<9x256xbf16, #tpu.memory_space<vmem>>, vector<1x256xbf16>
    %160 = vector.broadcast %159 : vector<1x256xbf16> to vector<4x256xbf16>
    %161 = arith.mulf %158, %160 : vector<4x256xbf16>
    %162 = vector.extract_strided_slice %145 {offsets = [0, 17], sizes = [4, 256], strides = [1, 1]} : vector<4x290xbf16> to vector<4x256xbf16>
    %c4_81 = arith.constant 4 : index
    %c0_82 = arith.constant 0 : index
    %163 = vector.load %arg4[%c4_81, %c0_82] : memref<9x256xbf16, #tpu.memory_space<vmem>>, vector<1x256xbf16>
    %164 = vector.broadcast %163 : vector<1x256xbf16> to vector<4x256xbf16>
    %165 = arith.mulf %162, %164 : vector<4x256xbf16>
    %166 = vector.extract_strided_slice %145 {offsets = [0, 18], sizes = [4, 256], strides = [1, 1]} : vector<4x290xbf16> to vector<4x256xbf16>
    %c5_83 = arith.constant 5 : index
    %c0_84 = arith.constant 0 : index
    %167 = vector.load %arg4[%c5_83, %c0_84] : memref<9x256xbf16, #tpu.memory_space<vmem>>, vector<1x256xbf16>
    %168 = vector.broadcast %167 : vector<1x256xbf16> to vector<4x256xbf16>
    %169 = arith.mulf %166, %168 : vector<4x256xbf16>
    %170 = vector.extract_strided_slice %145 {offsets = [0, 32], sizes = [4, 256], strides = [1, 1]} : vector<4x290xbf16> to vector<4x256xbf16>
    %c6_85 = arith.constant 6 : index
    %c0_86 = arith.constant 0 : index
    %171 = vector.load %arg4[%c6_85, %c0_86] : memref<9x256xbf16, #tpu.memory_space<vmem>>, vector<1x256xbf16>
    %172 = vector.broadcast %171 : vector<1x256xbf16> to vector<4x256xbf16>
    %173 = arith.mulf %170, %172 : vector<4x256xbf16>
    %174 = vector.extract_strided_slice %145 {offsets = [0, 33], sizes = [4, 256], strides = [1, 1]} : vector<4x290xbf16> to vector<4x256xbf16>
    %c7_87 = arith.constant 7 : index
    %c0_88 = arith.constant 0 : index
    %175 = vector.load %arg4[%c7_87, %c0_88] : memref<9x256xbf16, #tpu.memory_space<vmem>>, vector<1x256xbf16>
    %176 = vector.broadcast %175 : vector<1x256xbf16> to vector<4x256xbf16>
    %177 = arith.mulf %174, %176 : vector<4x256xbf16>
    %178 = vector.extract_strided_slice %145 {offsets = [0, 34], sizes = [4, 256], strides = [1, 1]} : vector<4x290xbf16> to vector<4x256xbf16>
    %c8_89 = arith.constant 8 : index
    %c0_90 = arith.constant 0 : index
    %179 = vector.load %arg4[%c8_89, %c0_90] : memref<9x256xbf16, #tpu.memory_space<vmem>>, vector<1x256xbf16>
    %180 = vector.broadcast %179 : vector<1x256xbf16> to vector<4x256xbf16>
    %181 = arith.mulf %178, %180 : vector<4x256xbf16>
    %182 = tpu.concatenate %149, %153, %157, %161, %165, %169, %173, %177, %181 in 0 : vector<4x256xbf16>, vector<4x256xbf16>, vector<4x256xbf16>, vector<4x256xbf16>, vector<4x256xbf16>, vector<4x256xbf16>, vector<4x256xbf16>, vector<4x256xbf16>, vector<4x256xbf16> -> vector<36x256xbf16>
    %cst_91 = arith.constant dense<0.000000e+00> : vector<4x256xf32>
    %183 = tpu.matmul %143, %182, %cst_91 {dimension_numbers = #tpu.dot_dimension_numbers<[1], [0], [0], [1], [0, 0, 1, 1], [], []>} : vector<4x36xbf16>, vector<36x256xbf16>, vector<4x256xf32> -> vector<4x256xf32>
    %c0_92 = arith.constant 0 : index
    %c0_93 = arith.constant 0 : index
    %184 = vector.load %arg11[%c0_92, %c0_93] : memref<4x1xf32, #tpu.memory_space<vmem>>, vector<4x1xf32>
    %185 = vector.broadcast %184 : vector<4x1xf32> to vector<4x256xf32>
    %186 = arith.addf %183, %185 : vector<4x256xf32>
    %cst_94 = arith.constant 0.000000e+00 : f32
    %187 = vector.broadcast %cst_94 : f32 to vector<4x256xf32>
    %188 = arith.maximumf %186, %187 : vector<4x256xf32>
    %c0_95 = arith.constant 0 : index
    %c0_96 = arith.constant 0 : index
    %c0_97 = arith.constant 0 : index
    %189 = vector.load %arg12[%c0_95, %c0_96, %c0_97] : memref<1x4x256xf32, #tpu.memory_space<vmem>>, vector<1x4x256xf32>
    %190 = vector.shape_cast %189 : vector<1x4x256xf32> to vector<4x256xf32>
    %191 = vector.shape_cast %188 : vector<4x256xf32> to vector<1x4x256xf32>
    tpu.vector_store %arg12[%c0_95, %c0_96, %c0_97], %191 {strides = array<i32>} : memref<1x4x256xf32, #tpu.memory_space<vmem>>, vector<1x4x256xf32>,
    return
  }
  func.func @transform_0(%arg0: i32) -> (i32, i32, i32) {
    %c0_i32 = arith.constant 0 : i32
    %c0_i32_0 = arith.constant 0 : i32
    %c0_i32_1 = arith.constant 0 : i32
    return %arg0, %c0_i32, %c0_i32_0 : i32, i32, i32
  }
  func.func @transform_1(%arg0: i32) -> (i32, i32, i32) {
    %c0_i32 = arith.constant 0 : i32
    %c0_i32_0 = arith.constant 0 : i32
    %c0_i32_1 = arith.constant 0 : i32
    return %arg0, %c0_i32, %c0_i32_0 : i32, i32, i32
  }
  func.func @transform_2(%arg0: i32) -> (i32, i32) {
    %c0_i32 = arith.constant 0 : i32
    %c0_i32_0 = arith.constant 0 : i32
    %c0_i32_1 = arith.constant 0 : i32
    return %c0_i32, %c0_i32_0 : i32, i32
  }
  func.func @transform_3(%arg0: i32) -> (i32, i32) {
    %c0_i32 = arith.constant 0 : i32
    %c0_i32_0 = arith.constant 0 : i32
    %c0_i32_1 = arith.constant 0 : i32
    return %c0_i32, %c0_i32_0 : i32, i32
  }
  func.func @transform_4(%arg0: i32) -> (i32, i32) {
    %c0_i32 = arith.constant 0 : i32
    %c0_i32_0 = arith.constant 0 : i32
    %c0_i32_1 = arith.constant 0 : i32
    return %c0_i32, %c0_i32_0 : i32, i32
  }
  func.func @transform_5(%arg0: i32) -> (i32, i32) {
    %c0_i32 = arith.constant 0 : i32
    %c0_i32_0 = arith.constant 0 : i32
    %c0_i32_1 = arith.constant 0 : i32
    return %c0_i32, %c0_i32_0 : i32, i32
  }
  func.func @transform_6(%arg0: i32) -> (i32, i32) {
    %c0_i32 = arith.constant 0 : i32
    %c0_i32_0 = arith.constant 0 : i32
    %c0_i32_1 = arith.constant 0 : i32
    return %c0_i32, %c0_i32_0 : i32, i32
  }
  func.func @transform_7(%arg0: i32) -> (i32, i32) {
    %c0_i32 = arith.constant 0 : i32
    %c0_i32_0 = arith.constant 0 : i32
    %c0_i32_1 = arith.constant 0 : i32
    return %c0_i32, %c0_i32_0 : i32, i32
  }
  func.func @transform_8(%arg0: i32) -> (i32, i32) {
    %c0_i32 = arith.constant 0 : i32
    %c0_i32_0 = arith.constant 0 : i32
    %c0_i32_1 = arith.constant 0 : i32
    return %c0_i32, %c0_i32_0 : i32, i32
  }
  func.func @transform_9(%arg0: i32) -> (i32, i32) {
    %c0_i32 = arith.constant 0 : i32
    %c0_i32_0 = arith.constant 0 : i32
    %c0_i32_1 = arith.constant 0 : i32
    return %c0_i32, %c0_i32_0 : i32, i32
  }
  func.func @transform_10(%arg0: i32) -> (i32, i32) {
    %c0_i32 = arith.constant 0 : i32
    %c0_i32_0 = arith.constant 0 : i32
    %c0_i32_1 = arith.constant 0 : i32
    return %c0_i32, %c0_i32_0 : i32, i32
  }
  func.func @transform_11(%arg0: i32) -> (i32, i32, i32) {
    %c0_i32 = arith.constant 0 : i32
    %c0_i32_0 = arith.constant 0 : i32
    %c0_i32_1 = arith.constant 0 : i32
    return %arg0, %c0_i32, %c0_i32_0 : i32, i32, i32
  }
}

</mosaic_0001>

<llo_original>
// kernel: unet_up_forward.1
$region0: #{unet_up_forward.1}
  #allocation0 [shape = 'u32[]', space=smem, size = 0x4, offset = 0x4, fixed_abs, tag = 'smem constant byte address 0x4 - core index']
  #allocation1 [shape = 'u32[144,128]{1,0:T(1,128)}', space=vmem, size = 0x12000, scoped, tag = 'internal scratch']
  %s0 = inlined_call_operand.vmem [shape: f32[2,4,64], index: 0, kind: input, shape index: {}]
  %s1 = inlined_call_operand.vmem [shape: f32[2,4,256], index: 1, kind: input, shape index: {}]
  %s2 = inlined_call_operand.vmem [shape: bf16[64,256], index: 2, kind: input, shape index: {}]
  %s3 = inlined_call_operand.vmem [shape: bf16[9,256], index: 3, kind: input, shape index: {}]
  %s4 = inlined_call_operand.vmem [shape: bf16[4,36], index: 4, kind: input, shape index: {}]
  %s5 = inlined_call_operand.vmem [shape: f32[4,1], index: 5, kind: input, shape index: {}]
  %s6 = inlined_call_operand.vmem [shape: bf16[4,36], index: 6, kind: input, shape index: {}]
  %s7 = inlined_call_operand.vmem [shape: bf16[4,36], index: 7, kind: input, shape index: {}]
  %s8 = inlined_call_operand.vmem [shape: f32[4,1], index: 8, kind: input, shape index: {}]
  %s9 = inlined_call_operand.vmem [shape: bf16[4,36], index: 9, kind: input, shape index: {}]
  %s10 = inlined_call_operand.vmem [shape: f32[4,1], index: 10, kind: input, shape index: {}]
  %s11 = inlined_call_operand.vmem [shape: f32[2,4,256], index: 11, kind: output, shape index: {}]
  %s12 = sld [smem:[#allocation0]]
  $region77: #{unet_up_forward.1} parent=0
    _
  %s14 = ssub.s32 1, %s12
  %s15 = scalar_select 0, %s14, %s12
  loop: start=0, step=1, limit=4
  $region2: #{unet_up_forward.1} parent=0 // loop_pre_header
    _
  $region3: #{unet_up_forward.1} parent=0 // loop_header
    %s17 = sphi 0, %s21
    %p18 = scmp.ge.s32.totalorder %s17, 4
    %s27 = sphi 0, %s29
    %s30 = sphi 0, %s27
    %s31 = sphi 0, %s30
    %s47 = sphi 0, %s31
    %s53 = sphi 0, %s55
    %s56 = sphi 0, %s53
    %s57 = sphi 0, %s56
    %s73 = sphi 0, %s57
    %s77 = sphi 0, %s77
    %s79 = sphi 0, %s77
    %s80 = sphi 0, %s79
    %s94 = sphi 0, %s80
    %s98 = sphi 0, %s98
    %s100 = sphi 0, %s98
    %s101 = sphi 0, %s100
    %s115 = sphi 0, %s101
    %s119 = sphi 0, %s119
    %s121 = sphi 0, %s119
    %s122 = sphi 0, %s121
    %s136 = sphi 0, %s122
    %s140 = sphi 0, %s140
    %s142 = sphi 0, %s140
    %s143 = sphi 0, %s142
    %s157 = sphi 0, %s143
    %s161 = sphi 0, %s161
    %s163 = sphi 0, %s161
    %s164 = sphi 0, %s163
    %s178 = sphi 0, %s164
    %s182 = sphi 0, %s182
    %s184 = sphi 0, %s182
    %s185 = sphi 0, %s184
    %s199 = sphi 0, %s185
    %s203 = sphi 0, %s203
    %s205 = sphi 0, %s203
    %s206 = sphi 0, %s205
    %s220 = sphi 0, %s206
    %s224 = sphi 0, %s224
    %s226 = sphi 0, %s224
    %s227 = sphi 0, %s226
    %s241 = sphi 0, %s227
    %s245 = sphi 0, %s245
    %s247 = sphi 0, %s245
    %s248 = sphi 0, %s247
    %s262 = sphi 0, %s248
    %s268 = sphi 0, %s270
    %s271 = sphi 0, %s268
    %s272 = sphi 0, %s271
    %s288 = sphi 0, %s272
  $region4: #{unet_up_forward.1} parent=0 // loop_header_branch
    %20 = sbr.rel (%p18) target = $region8
  $region5: #{unet_up_forward.1} parent=0 // loop_body
    %s22 = ssub.s32 %s17, 1
    %s23 = ssub.s32 %s17, 2
    %s24 = sadd.s32 %s17, 1
    %s25 = ssub.s32 %s17, %s24
    %p26 = scmp.eq.s32.totalorder %s25, 0
    %s28 = sadd.s32 %s27, 1
    %s29 = scalar_select %p26, %s27, %s28
    %p32 = pneg %p26
    %p33 = scmp.eq.s32.totalorder %s17, 1
    %p34 = por %p32, %p33
    %p35 = scmp.ne.s32.totalorder %s27, %s30
    %p36 = scmp.eq.s32.totalorder %s17, 0
    %p37 = por %p35, %p36
    %p38 = scmp.ne.s32.totalorder %s27, %s30
    %p39 = scmp.eq.s32.totalorder %s22, 1
    %p40 = por %p38, %p39
    %p41 = scmp.ne.s32.totalorder %s30, %s31
    %p42 = scmp.eq.s32.totalorder %s22, 0
    %p43 = por %p41, %p42
    %p44 = scmp.ne.s32.totalorder %s30, %s31
    %p45 = scmp.eq.s32.totalorder %s23, 1
    %p46 = por %p44, %p45
    %p48 = scmp.ne.s32.totalorder %s31, %s47
    %p49 = scmp.eq.s32.totalorder %s23, 0
    %p50 = por %p48, %p49
    %s51 = ssub.s32 %s17, %s24
    %p52 = scmp.eq.s32.totalorder %s51, 0
    %s54 = sadd.s32 %s53, 1
    %s55 = scalar_select %p52, %s53, %s54
    %p58 = pneg %p52
    %p59 = scmp.eq.s32.totalorder %s17, 1
    %p60 = por %p58, %p59
    %p61 = scmp.ne.s32.totalorder %s53, %s56
    %p62 = scmp.eq.s32.totalorder %s17, 0
    %p63 = por %p61, %p62
    %p64 = scmp.ne.s32.totalorder %s53, %s56
    %p65 = scmp.eq.s32.totalorder %s22, 1
    %p66 = por %p64, %p65
    %p67 = scmp.ne.s32.totalorder %s56, %s57
    %p68 = scmp.eq.s32.totalorder %s22, 0
    %p69 = por %p67, %p68
    %p70 = scmp.ne.s32.totalorder %s56, %s57
    %p71 = scmp.eq.s32.totalorder %s23, 1
    %p72 = por %p70, %p71
    %p74 = scmp.ne.s32.totalorder %s57, %s73
    %p75 = scmp.eq.s32.totalorder %s23, 0
    %p76 = por %p74, %p75
    %s78 = sadd.s32 %s77, 1
    %p81 = scmp.eq.s32.totalorder %s17, 1
    %p82 = scmp.ne.s32.totalorder %s77, %s79
    %p83 = scmp.eq.s32.totalorder %s17, 0
    %p84 = por %p82, %p83
    %p85 = scmp.ne.s32.totalorder %s77, %s79
    %p86 = scmp.eq.s32.totalorder %s22, 1
    %p87 = por %p85, %p86
    %p88 = scmp.ne.s32.totalorder %s79, %s80
    %p89 = scmp.eq.s32.totalorder %s22, 0
    %p90 = por %p88, %p89
    %p91 = scmp.ne.s32.totalorder %s79, %s80
    %p92 = scmp.eq.s32.totalorder %s23, 1
    %p93 = por %p91, %p92
    %p95 = scmp.ne.s32.totalorder %s80, %s94
    %p96 = scmp.eq.s32.totalorder %s23, 0
    %p97 = por %p95, %p96
    %s99 = sadd.s32 %s98, 1
    %p102 = scmp.eq.s32.totalorder %s17, 1
    %p103 = scmp.ne.s32.totalorder %s98, %s100
    %p104 = scmp.eq.s32.totalorder %s17, 0
    %p105 = por %p103, %p104
    %p106 = scmp.ne.s32.totalorder %s98, %s100
    %p107 = scmp.eq.s32.totalorder %s22, 1
    %p108 = por %p106, %p107
    %p109 = scmp.ne.s32.totalorder %s100, %s101
    %p110 = scmp.eq.s32.totalorder %s22, 0
    %p111 = por %p109, %p110
    %p112 = scmp.ne.s32.totalorder %s100, %s101
    %p113 = scmp.eq.s32.totalorder %s23, 1
    %p114 = por %p112, %p113
    %p116 = scmp.ne.s32.totalorder %s101, %s115
    %p117 = scmp.eq.s32.totalorder %s23, 0
    %p118 = por %p116, %p117
    %s120 = sadd.s32 %s119, 1
    %p123 = scmp.eq.s32.totalorder %s17, 1
    %p124 = scmp.ne.s32.totalorder %s119, %s121
    %p125 = scmp.eq.s32.totalorder %s17, 0
    %p126 = por %p124, %p125
    %p127 = scmp.ne.s32.totalorder %s119, %s121
    %p128 = scmp.eq.s32.totalorder %s22, 1
    %p129 = por %p127, %p128
    %p130 = scmp.ne.s32.totalorder %s121, %s122
    %p131 = scmp.eq.s32.totalorder %s22, 0
    %p132 = por %p130, %p131
    %p133 = scmp.ne.s32.totalorder %s121, %s122
    %p134 = scmp.eq.s32.totalorder %s23, 1
    %p135 = por %p133, %p134
    %p137 = scmp.ne.s32.totalorder %s122, %s136
    %p138 = scmp.eq.s32.totalorder %s23, 0
    %p139 = por %p137, %p138
    %s141 = sadd.s32 %s140, 1
    %p144 = scmp.eq.s32.totalorder %s17, 1
    %p145 = scmp.ne.s32.totalorder %s140, %s142
    %p146 = scmp.eq.s32.totalorder %s17, 0
    %p147 = por %p145, %p146
    %p148 = scmp.ne.s32.totalorder %s140, %s142
    %p149 = scmp.eq.s32.totalorder %s22, 1
    %p150 = por %p148, %p149
    %p151 = scmp.ne.s32.totalorder %s142, %s143
    %p152 = scmp.eq.s32.totalorder %s22, 0
    %p153 = por %p151, %p152
    %p154 = scmp.ne.s32.totalorder %s142, %s143
    %p155 = scmp.eq.s32.totalorder %s23, 1
    %p156 = por %p154, %p155
    %p158 = scmp.ne.s32.totalorder %s143, %s157
    %p159 = scmp.eq.s32.totalorder %s23, 0
    %p160 = por %p158, %p159
    %s162 = sadd.s32 %s161, 1
    %p165 = scmp.eq.s32.totalorder %s17, 1
    %p166 = scmp.ne.s32.totalorder %s161, %s163
    %p167 = scmp.eq.s32.totalorder %s17, 0
    %p168 = por %p166, %p167
    %p169 = scmp.ne.s32.totalorder %s161, %s163
    %p170 = scmp.eq.s32.totalorder %s22, 1
    %p171 = por %p169, %p170
    %p172 = scmp.ne.s32.totalorder %s163, %s164
    %p173 = scmp.eq.s32.totalorder %s22, 0
    %p174 = por %p172, %p173
    %p175 = scmp.ne.s32.totalorder %s163, %s164
    %p176 = scmp.eq.s32.totalorder %s23, 1
    %p177 = por %p175, %p176
    %p179 = scmp.ne.s32.totalorder %s164, %s178
    %p180 = scmp.eq.s32.totalorder %s23, 0
    %p181 = por %p179, %p180
    %s183 = sadd.s32 %s182, 1
    %p186 = scmp.eq.s32.totalorder %s17, 1
    %p187 = scmp.ne.s32.totalorder %s182, %s184
    %p188 = scmp.eq.s32.totalorder %s17, 0
    %p189 = por %p187, %p188
    %p190 = scmp.ne.s32.totalorder %s182, %s184
    %p191 = scmp.eq.s32.totalorder %s22, 1
    %p192 = por %p190, %p191
    %p193 = scmp.ne.s32.totalorder %s184, %s185
    %p194 = scmp.eq.s32.totalorder %s22, 0
    %p195 = por %p193, %p194
    %p196 = scmp.ne.s32.totalorder %s184, %s185
    %p197 = scmp.eq.s32.totalorder %s23, 1
    %p198 = por %p196, %p197
    %p200 = scmp.ne.s32.totalorder %s185, %s199
    %p201 = scmp.eq.s32.totalorder %s23, 0
    %p202 = por %p200, %p201
    %s204 = sadd.s32 %s203, 1
    %p207 = scmp.eq.s32.totalorder %s17, 1
    %p208 = scmp.ne.s32.totalorder %s203, %s205
    %p209 = scmp.eq.s32.totalorder %s17, 0
    %p210 = por %p208, %p209
    %p211 = scmp.ne.s32.totalorder %s203, %s205
    %p212 = scmp.eq.s32.totalorder %s22, 1
    %p213 = por %p211, %p212
    %p214 = scmp.ne.s32.totalorder %s205, %s206
    %p215 = scmp.eq.s32.totalorder %s22, 0
    %p216 = por %p214, %p215
    %p217 = scmp.ne.s32.totalorder %s205, %s206
    %p218 = scmp.eq.s32.totalorder %s23, 1
    %p219 = por %p217, %p218
    %p221 = scmp.ne.s32.totalorder %s206, %s220
    %p222 = scmp.eq.s32.totalorder %s23, 0
    %p223 = por %p221, %p222
    %s225 = sadd.s32 %s224, 1
    %p228 = scmp.eq.s32.totalorder %s17, 1
    %p229 = scmp.ne.s32.totalorder %s224, %s226
    %p230 = scmp.eq.s32.totalorder %s17, 0
    %p231 = por %p229, %p230
    %p232 = scmp.ne.s32.totalorder %s224, %s226
    %p233 = scmp.eq.s32.totalorder %s22, 1
    %p234 = por %p232, %p233
    %p235 = scmp.ne.s32.totalorder %s226, %s227
    %p236 = scmp.eq.s32.totalorder %s22, 0
    %p237 = por %p235, %p236
    %p238 = scmp.ne.s32.totalorder %s226, %s227
    %p239 = scmp.eq.s32.totalorder %s23, 1
    %p240 = por %p238, %p239
    %p242 = scmp.ne.s32.totalorder %s227, %s241
    %p243 = scmp.eq.s32.totalorder %s23, 0
    %p244 = por %p242, %p243
    %s246 = sadd.s32 %s245, 1
    %p249 = scmp.eq.s32.totalorder %s17, 1
    %p250 = scmp.ne.s32.totalorder %s245, %s247
    %p251 = scmp.eq.s32.totalorder %s17, 0
    %p252 = por %p250, %p251
    %p253 = scmp.ne.s32.totalorder %s245, %s247
    %p254 = scmp.eq.s32.totalorder %s22, 1
    %p255 = por %p253, %p254
    %p256 = scmp.ne.s32.totalorder %s247, %s248
    %p257 = scmp.eq.s32.totalorder %s22, 0
    %p258 = por %p256, %p257
    %p259 = scmp.ne.s32.totalorder %s247, %s248
    %p260 = scmp.eq.s32.totalorder %s23, 1
    %p261 = por %p259, %p260
    %p263 = scmp.ne.s32.totalorder %s248, %s262
    %p264 = scmp.eq.s32.totalorder %s23, 0
    %p265 = por %p263, %p264
    %s266 = ssub.s32 %s17, %s24
    %p267 = scmp.eq.s32.totalorder %s266, 0
    %s269 = sadd.s32 %s268, 1
    %s270 = scalar_select %p267, %s268, %s269
    %p273 = pneg %p267
    %p274 = scmp.eq.s32.totalorder %s17, 1
    %p275 = por %p273, %p274
    %p276 = scmp.ne.s32.totalorder %s268, %s271
    %p277 = scmp.eq.s32.totalorder %s17, 0
    %p278 = por %p276, %p277
    %p279 = scmp.ne.s32.totalorder %s268, %s271
    %p280 = scmp.eq.s32.totalorder %s22, 1
    %p281 = por %p279, %p280
    %p282 = scmp.ne.s32.totalorder %s271, %s272
    %p283 = scmp.eq.s32.totalorder %s22, 0
    %p284 = por %p282, %p283
    %p285 = scmp.ne.s32.totalorder %s271, %s272
    %p286 = scmp.eq.s32.totalorder %s23, 1
    %p287 = por %p285, %p286
    %p289 = scmp.ne.s32.totalorder %s272, %s288
    %p290 = scmp.eq.s32.totalorder %s23, 0
    %p291 = por %p289, %p290
    %p292 = scmp.le.s32.totalorder 1, %s17
    %p293 = scmp.lt.s32.totalorder %s17, 3
    %p294 = pnand %p292, %p293
    %p295 = pneg %p294
    // Predicated region
    $region9: #{unet_up_forward.1} parent=5 // pred_check
      _
    $region10: #{unet_up_forward.1} parent=5 // pred_check_branch
      %297 = sbr.rel (%p294) target = $region12
    $region11: #{unet_up_forward.1} parent=5 // pred_region
      %s298 = ssub.s32 %s17, 1
      // Predicated region
      $region13: #{unet_up_forward.1} parent=11 // pred_check
        %p299 = pneg %p90
      $region14: #{unet_up_forward.1} parent=11 // pred_check_branch
        %301 = sbr.rel (%p299) target = $region16
      $region15: #{unet_up_forward.1} parent=11 // pred_region
        _
      $region16: #{unet_up_forward.1} parent=11 // pred_fallthru
        _
      // Predicated region
      $region17: #{unet_up_forward.1} parent=11 // pred_check
        %p302 = pneg %p111
      $region18: #{unet_up_forward.1} parent=11 // pred_check_branch
        %304 = sbr.rel (%p302) target = $region20
      $region19: #{unet_up_forward.1} parent=11 // pred_region
        _
      $region20: #{unet_up_forward.1} parent=11 // pred_fallthru
        _
      // Predicated region
      $region21: #{unet_up_forward.1} parent=11 // pred_check
        %p305 = pneg %p132
      $region22: #{unet_up_forward.1} parent=11 // pred_check_branch
        %307 = sbr.rel (%p305) target = $region24
      $region23: #{unet_up_forward.1} parent=11 // pred_region
        _
      $region24: #{unet_up_forward.1} parent=11 // pred_fallthru
        _
      // Predicated region
      $region25: #{unet_up_forward.1} parent=11 // pred_check
        %p308 = pneg %p153
      $region26: #{unet_up_forward.1} parent=11 // pred_check_branch
        %310 = sbr.rel (%p308) target = $region28
      $region27: #{unet_up_forward.1} parent=11 // pred_region
        _
      $region28: #{unet_up_forward.1} parent=11 // pred_fallthru
        _
      // Predicated region
      $region29: #{unet_up_forward.1} parent=11 // pred_check
        %p311 = pneg %p174
      $region30: #{unet_up_forward.1} parent=11 // pred_check_branch
        %313 = sbr.rel (%p311) target = $region32
      $region31: #{unet_up_forward.1} parent=11 // pred_region
        _
      $region32: #{unet_up_forward.1} parent=11 // pred_fallthru
        _
      // Predicated region
      $region33: #{unet_up_forward.1} parent=11 // pred_check
        %p314 = pneg %p195
      $region34: #{unet_up_forward.1} parent=11 // pred_check_branch
        %316 = sbr.rel (%p314) target = $region36
      $region35: #{unet_up_forward.1} parent=11 // pred_region
        _
      $region36: #{unet_up_forward.1} parent=11 // pred_fallthru
        _
      // Predicated region
      $region37: #{unet_up_forward.1} parent=11 // pred_check
        %p317 = pneg %p216
      $region38: #{unet_up_forward.1} parent=11 // pred_check_branch
        %319 = sbr.rel (%p317) target = $region40
      $region39: #{unet_up_forward.1} parent=11 // pred_region
        _
      $region40: #{unet_up_forward.1} parent=11 // pred_fallthru
        _
      // Predicated region
      $region41: #{unet_up_forward.1} parent=11 // pred_check
        %p320 = pneg %p237
      $region42: #{unet_up_forward.1} parent=11 // pred_check_branch
        %322 = sbr.rel (%p320) target = $region44
      $region43: #{unet_up_forward.1} parent=11 // pred_region
        _
      $region44: #{unet_up_forward.1} parent=11 // pred_fallthru
        _
      // Predicated region
      $region45: #{unet_up_forward.1} parent=11 // pred_check
        %p323 = pneg %p258
      $region46: #{unet_up_forward.1} parent=11 // pred_check_branch
        %325 = sbr.rel (%p323) target = $region48
      $region47: #{unet_up_forward.1} parent=11 // pred_region
        _
      $region48: #{unet_up_forward.1} parent=11 // pred_fallthru
        _
    $region12: #{unet_up_forward.1} parent=5 // pred_fallthru
      _
    %p326 = scmp.lt.s32.totalorder %s17, 2
    // Predicated region
    $region49: #{unet_up_forward.1} parent=5 // pred_check
      %p327 = pneg %p326
    $region50: #{unet_up_forward.1} parent=5 // pred_check_branch
      %329 = sbr.rel (%p327) target = $region52
    $region51: #{unet_up_forward.1} parent=5 // pred_region
      // Predicated region
      $region53: #{unet_up_forward.1} parent=51 // pred_check
        %p330 = pneg %p37
      $region54: #{unet_up_forward.1} parent=51 // pred_check_branch
        %332 = sbr.rel (%p330) target = $region56
      $region55: #{unet_up_forward.1} parent=51 // pred_region
        %p333 = scmp.lt.s32.totalorder %s17, 1
        %s334 = scalar_select %p333, %s17, 1
        %s335 = smul.addr %s334, 4
        %s336 = scalar_lea.vmem %s0, %s335
      $region56: #{unet_up_forward.1} parent=51 // pred_fallthru
        _
      // Predicated region
      $region57: #{unet_up_forward.1} parent=51 // pred_check
        %p337 = pneg %p63
      $region58: #{unet_up_forward.1} parent=51 // pred_check_branch
        %339 = sbr.rel (%p337) target = $region60
      $region59: #{unet_up_forward.1} parent=51 // pred_region
        %p340 = scmp.lt.s32.totalorder %s17, 1
        %s341 = scalar_select %p340, %s17, 1
        %s342 = smul.addr %s341, 2
        %s343 = smul.addr %s342, 4
        %s344 = scalar_lea.vmem %s1, %s343
      $region60: #{unet_up_forward.1} parent=51 // pred_fallthru
        _
    $region52: #{unet_up_forward.1} parent=5 // pred_fallthru
      _
    %p345 = scmp.le.s32.totalorder 1, %s17
    %p346 = scmp.lt.s32.totalorder %s17, 3
    %p347 = pnand %p345, %p346
    %p348 = pneg %p347
    // Predicated region
    $region61: #{unet_up_forward.1} parent=5 // pred_check
      _
    $region62: #{unet_up_forward.1} parent=5 // pred_check_branch
      %350 = sbr.rel (%p347) target = $region64
    $region63: #{unet_up_forward.1} parent=5 // pred_region
      %s351 = ssub.s32 %s17, 1
      %p352 = scmp.lt.s32.totalorder %s22, 1
      %s353 = scalar_select %p352, %s22, 1
      %s354 = smul.addr %s353, 4
      %s355 = scalar_lea.vmem %s0, %s354
      %p356 = pneg %p43
      %p357 = pneg %p40
      %p358 = scmp.lt.s32.totalorder %s22, 1
      %s359 = scalar_select %p358, %s22, 1
      %s360 = smul.addr %s359, 2
      %s361 = smul.addr %s360, 4
      %s362 = scalar_lea.vmem %s1, %s361
      %p363 = pneg %p69
      %p364 = pneg %p66
      %p365 = pneg %p90
      %p366 = pneg %p87
      %p367 = pneg %p111
      %p368 = pneg %p108
      %p369 = pneg %p132
      %p370 = pneg %p129
      %p371 = pneg %p153
      %p372 = pneg %p150
      %p373 = pneg %p174
      %p374 = pneg %p171
      %p375 = pneg %p195
      %p376 = pneg %p192
      %p377 = pneg %p216
      %p378 = pneg %p213
      %p379 = pneg %p237
      %p380 = pneg %p234
      %p381 = pneg %p258
      %p382 = pneg %p255
      %p383 = pneg %p284
      %p384 = pneg %p281
      %p385 = scmp.lt.s32.totalorder %s22, 1
      %s386 = scalar_select %p385, %s22, 1
      %s387 = smul.addr %s386, 2
      %s388 = smul.addr %s387, 4
      %s389 = scalar_lea.vmem %s11, %s388
      %p390 = scmp.lt.s32.totalorder %s22, 1
      %s391 = scalar_select %p390, %s22, 1
      %s392 = smul.addr %s391, 4
      %s393 = scalar_lea.vmem %s0, %s392
      %p394 = scmp.lt.s32.totalorder %s22, 1
      %s395 = scalar_select %p394, %s22, 1
      %s396 = smul.addr %s395, 2
      %s397 = smul.addr %s396, 4
      %s398 = scalar_lea.vmem %s1, %s397
      %p399 = scmp.lt.s32.totalorder %s22, 1
      %s400 = scalar_select %p399, %s22, 1
      %s401 = smul.addr %s400, 2
      %s402 = smul.addr %s401, 4
      %s403 = scalar_lea.vmem %s11, %s402
      %v405 = vld [vmem:[%s393] sm:$0xf]
      %v406 = vpack.c.bf16 %v405, %v405
      %v407 = vld [vmem:[%s2] sm:$0xff]
      %v408 = vld [vmem:[%s2 + $0x8] sm:$0xff]
      %v409 = vld [vmem:[%s2 + $0x10] sm:$0xff]
      %v410 = vld [vmem:[%s2 + $0x18] sm:$0xff]
      %v411 = vld [vmem:[%s2 + $0x20] sm:$0xff]
      %v412 = vld [vmem:[%s2 + $0x28] sm:$0xff]
      %v413 = vld [vmem:[%s2 + $0x30] sm:$0xff]
      %v414 = vld [vmem:[%s2 + $0x38] sm:$0xff]
      %v423 = vunpack.c.l.b16 %v407
      %v424 = vunpack.c.h.b16 %v407
      %v425 = vunpack.c.l.b16 %v408
      %v426 = vunpack.c.h.b16 %v408
      %v427 = vunpack.c.l.b16 %v409
      %v428 = vunpack.c.h.b16 %v409
      %v429 = vunpack.c.l.b16 %v410
      %v430 = vunpack.c.h.b16 %v410
      %v431 = vunpack.c.l.b16 %v411
      %v432 = vunpack.c.h.b16 %v411
      %v433 = vunpack.c.l.b16 %v412
      %v434 = vunpack.c.h.b16 %v412
      %v435 = vunpack.c.l.b16 %v413
      %v436 = vunpack.c.h.b16 %v413
      %v437 = vunpack.c.l.b16 %v414
      %v438 = vunpack.c.h.b16 %v414
      %v439 = vpack.c.b16 %v425, %v423
      %v440 = vpack.c.b16 %v426, %v424
      %v441 = vpack.c.b16 %v429, %v427
      %v442 = vpack.c.b16 %v430, %v428
      %v443 = vpack.c.b16 %v433, %v431
      %v444 = vpack.c.b16 %v434, %v432
      %v445 = vpack.c.b16 %v437, %v435
      %v446 = vpack.c.b16 %v438, %v436
      %vm455 = vcmask 523264
      %v457 = vsel %vm455, %v406, 0
      %459 = vmatprep.subr.bf16.mxu0 %v440
      %460 = vmatpush1.bf16.msra.mxu0 %v439
      %461 = vmatprep.subr.bf16.mxu0 %v442
      %462 = vmatpush1.bf16.msra.mxu0 %v441
      %463 = vmatprep.subr.bf16.mxu0 %v444
      %464 = vmatpush1.bf16.msra.mxu0 %v443
      %465 = vmatprep.subr.bf16.mxu0 %v446
      %466 = vmatpush1.bf16.msra.mxu0 %v445
      %467 = vmatprep.subr.bf16.mxu0 0
      %468 = vmatpush1.bf16.msra.mxu0 0
      %469 = vmatprep.subr.bf16.mxu0 0
      %470 = vmatpush1.bf16.msra.mxu0 0
      %471 = vmatprep.subr.bf16.mxu0 0
      %472 = vmatpush1.bf16.msra.mxu0 0
      %473 = vmatprep.subr.bf16.mxu0 0
      %474 = vmatpush1.bf16.msra.mxu0 0
      %475 = vmatprep.subr.bf16.mxu0 0
      %476 = vmatpush1.bf16.msra.mxu0 0
      %477 = vmatprep.subr.bf16.mxu0 0
      %478 = vmatpush1.bf16.msra.mxu0 0
      %479 = vmatprep.subr.bf16.mxu0 0
      %480 = vmatpush1.bf16.msra.mxu0 0
      %481 = vmatprep.subr.bf16.mxu0 0
      %482 = vmatpush1.bf16.msra.mxu0 0
      %483 = vmatprep.subr.bf16.mxu0 0
      %484 = vmatpush1.bf16.msra.mxu0 0
      %485 = vmatprep.subr.bf16.mxu0 0
      %486 = vmatpush1.bf16.msra.mxu0 0
      %487 = vmatprep.subr.bf16.mxu0 0
      %488 = vmatpush1.bf16.msra.mxu0 0
      %489 = vmatprep.subr.bf16.mxu0 0
      %490 = vmatpush1.bf16.msra.mxu0 0
      %491 = vmatprep.mubr.bf16.mxu0 0
      %492 = vmatmul.mubr.bf16.gmra.mrb[0].mxu0 %v457
      %v493 = vpop.f32.mrb[0].mxu0
      %v494 = vadd.f32 0.0, %v493
      %v495 = vpop.f32.mrb[0].mxu0
      %v496 = vadd.f32 0.0, %v495
      %v497 = vpop.f32.mrb[0].mxu0
      %v498 = vpop.f32.mrb[0].mxu0
      %499 = vdwg.mxu0
      %v500 = vpack.c.bf16 %v494, %v494
      %v501 = vpack.c.bf16 %v496, %v496
      %v502 = vld [vmem:[%s4] sm:$0x3]
      %505 = vrot.lane.b32.xlu0 %v500, 17
      %v506 = vpop.permute.xlu0 %505
      %507 = vrot.lane.b32.xlu0 %v501, 17
      %v508 = vpop.permute.xlu0 %507
      %vm509 = vcmask 138240
      %v510 = vsel %vm509, %v506, %v508
      %vm512 = vcmask 138240
      %v515 = vsel %vm512, 0, %v506
      %v518 = vsel %vm512, %v508, 0
      %v520 = vld [vmem:[%s3] sm:$0x11]
      %v522 = vunpack.c.l.b16 %v520
      %v523 = vunpack.c.h.b16 %v520
      %v524 = vpack.c.b16 %v522, %v522
      %v525 = vpack.c.b16 %v523, %v523
      %v527 = vpack.i.b16 %v524, %v524
      %v529 = vlaneseq
      %v530 = vshrl.u32 %v529, 7
      %v531 = vsub.s32 0, %v530
      %v532 = vrot.slane %v527, %v531
      %v534 = vpack.i.b16 %v525, %v525
      %v536 = vlaneseq
      %v537 = vshrl.u32 %v536, 7
      %v538 = vsub.s32 0, %v537
      %v539 = vrot.slane %v534, %v538
      %v540 = vmul.bf16 %v515, %v532
      %v541 = vmul.bf16 %v510, %v539
      %v542 = vshrl.u32 %v524, 16
      %v543 = vpack.i.b16 %v542, %v542
      %v545 = vlaneseq
      %v546 = vshrl.u32 %v545, 7
      %v547 = vsub.s32 0, %v546
      %v548 = vrot.slane %v543, %v547
      %v549 = vshrl.u32 %v525, 16
      %v550 = vpack.i.b16 %v549, %v549
      %v552 = vlaneseq
      %v553 = vshrl.u32 %v552, 7
      %v554 = vsub.s32 0, %v553
      %v555 = vrot.slane %v550, %v554
      %558 = vrot.lane.b32.xlu0 %v548, 1
      %v559 = vpop.permute.xlu0 %558
      %560 = vrot.lane.b32.xlu0 %v555, 1
      %v561 = vpop.permute.xlu0 %560
      %vm562 = vcmask 7168
      %v563 = vsel %vm562, %v559, %v561
      %v567 = vmul.bf16 %v515, %v559
      %v568 = vmul.bf16 %v510, %v563
      %v569 = vmul.bf16 %v518, %v561
      %v570 = vld [vmem:[%s3] sm:$0x22]
      %v572 = vunpack.c.l.b16 %v570
      %v573 = vunpack.c.h.b16 %v570
      %v574 = vpack.c.b16 %v572, %v572
      %v575 = vpack.c.b16 %v573, %v573
      %v577 = vpack.i.b16 %v574, %v574
      %v579 = vlaneseq
      %v580 = vshrl.u32 %v579, 7
      %v581 = vsub.s32 1, %v580
      %v582 = vrot.slane %v577, %v581
      %v584 = vpack.i.b16 %v575, %v575
      %v586 = vlaneseq
      %v587 = vshrl.u32 %v586, 7
      %v588 = vsub.s32 1, %v587
      %v589 = vrot.slane %v584, %v588
      %592 = vrot.lane.b32.xlu0 %v582, 2
      %v593 = vpop.permute.xlu0 %592
      %594 = vrot.lane.b32.xlu0 %v589, 2
      %v595 = vpop.permute.xlu0 %594
      %vm596 = vcmask 15360
      %v597 = vsel %vm596, %v593, %v595
      %v601 = vmul.bf16 %v515, %v593
      %v602 = vmul.bf16 %v510, %v597
      %v603 = vmul.bf16 %v518, %v595
      %v604 = vshrl.u32 %v574, 16
      %v605 = vpack.i.b16 %v604, %v604
      %v607 = vlaneseq
      %v608 = vshrl.u32 %v607, 7
      %v609 = vsub.s32 1, %v608
      %v610 = vrot.slane %v605, %v609
      %v611 = vshrl.u32 %v575, 16
      %v612 = vpack.i.b16 %v611, %v611
      %v614 = vlaneseq
      %v615 = vshrl.u32 %v614, 7
      %v616 = vsub.s32 1, %v615
      %v617 = vrot.slane %v612, %v616
      %620 = vrot.lane.b32.xlu0 %v610, 16
      %v621 = vpop.permute.xlu0 %620
      %622 = vrot.lane.b32.xlu0 %v617, 16
      %v623 = vpop.permute.xlu0 %622
      %vm624 = vcmask 130048
      %v625 = vsel %vm624, %v621, %v623
      %v629 = vmul.bf16 %v515, %v621
      %v630 = vmul.bf16 %v510, %v625
      %v631 = vmul.bf16 %v518, %v623
      %v632 = vld [vmem:[%s3] sm:$0x44]
      %v634 = vunpack.c.l.b16 %v632
      %v635 = vunpack.c.h.b16 %v632
      %v636 = vpack.c.b16 %v634, %v634
      %v637 = vpack.c.b16 %v635, %v635
      %v639 = vpack.i.b16 %v636, %v636
      %v641 = vlaneseq
      %v642 = vshrl.u32 %v641, 7
      %v643 = vsub.s32 2, %v642
      %v644 = vrot.slane %v639, %v643
      %v646 = vpack.i.b16 %v637, %v637
      %v648 = vlaneseq
      %v649 = vshrl.u32 %v648, 7
      %v650 = vsub.s32 2, %v649
      %v651 = vrot.slane %v646, %v650
      %654 = vrot.lane.b32.xlu0 %v644, 17
      %v655 = vpop.permute.xlu0 %654
      %656 = vrot.lane.b32.xlu0 %v651, 17
      %v657 = vpop.permute.xlu0 %656
      %v658 = vsel %vm509, %v655, %v657
      %v662 = vmul.bf16 %v515, %v655
      %v663 = vmul.bf16 %v510, %v658
      %v664 = vmul.bf16 %v518, %v657
      %v665 = vshrl.u32 %v636, 16
      %v666 = vpack.i.b16 %v665, %v665
      %v668 = vlaneseq
      %v669 = vshrl.u32 %v668, 7
      %v670 = vsub.s32 2, %v669
      %v671 = vrot.slane %v666, %v670
      %v672 = vshrl.u32 %v637, 16
      %v673 = vpack.i.b16 %v672, %v672
      %v675 = vlaneseq
      %v676 = vshrl.u32 %v675, 7
      %v677 = vsub.s32 2, %v676
      %v678 = vrot.slane %v673, %v677
      %681 = vrot.lane.b32.xlu0 %v671, 18
      %v682 = vpop.permute.xlu0 %681
      %683 = vrot.lane.b32.xlu0 %v678, 18
      %v684 = vpop.permute.xlu0 %683
      %vm685 = vcmask 146432
      %v686 = vsel %vm685, %v682, %v684
      %v690 = vmul.bf16 %v515, %v682
      %v691 = vmul.bf16 %v510, %v686
      %v692 = vmul.bf16 %v518, %v684
      %v693 = vld [vmem:[%s3] sm:$0x88]
      %v695 = vunpack.c.l.b16 %v693
      %v696 = vunpack.c.h.b16 %v693
      %v697 = vpack.c.b16 %v695, %v695
      %v698 = vpack.c.b16 %v696, %v696
      %v700 = vpack.i.b16 %v697, %v697
      %v702 = vlaneseq
      %v703 = vshrl.u32 %v702, 7
      %v704 = vsub.s32 3, %v703
      %v705 = vrot.slane %v700, %v704
      %v707 = vpack.i.b16 %v698, %v698
      %v709 = vlaneseq
      %v710 = vshrl.u32 %v709, 7
      %v711 = vsub.s32 3, %v710
      %v712 = vrot.slane %v707, %v711
      %715 = vrot.lane.b32.xlu0 %v705, 32
      %v716 = vpop.permute.xlu0 %715
      %717 = vrot.lane.b32.xlu0 %v712, 32
      %v718 = vpop.permute.xlu0 %717
      %vm719 = vcmask 261120
      %v720 = vsel %vm719, %v716, %v718
      %v724 = vmul.bf16 %v515, %v716
      %v725 = vmul.bf16 %v510, %v720
      %v726 = vmul.bf16 %v518, %v718
      %v727 = vshrl.u32 %v697, 16
      %v728 = vpack.i.b16 %v727, %v727
      %v730 = vlaneseq
      %v731 = vshrl.u32 %v730, 7
      %v732 = vsub.s32 3, %v731
      %v733 = vrot.slane %v728, %v732
      %v734 = vshrl.u32 %v698, 16
      %v735 = vpack.i.b16 %v734, %v734
      %v737 = vlaneseq
      %v738 = vshrl.u32 %v737, 7
      %v739 = vsub.s32 3, %v738
      %v740 = vrot.slane %v735, %v739
      %743 = vrot.lane.b32.xlu0 %v733, 33
      %v744 = vpop.permute.xlu0 %743
      %745 = vrot.lane.b32.xlu0 %v740, 33
      %v746 = vpop.permute.xlu0 %745
      %vm747 = vcmask 269312
      %v748 = vsel %vm747, %v744, %v746
      %v752 = vmul.bf16 %v515, %v744
      %v753 = vmul.bf16 %v510, %v748
      %v754 = vmul.bf16 %v518, %v746
      %v755 = vld [vmem:[%s3 + $0x8] sm:$0x11]
      %v757 = vunpack.c.l.b16 %v755
      %v758 = vunpack.c.h.b16 %v755
      %v759 = vpack.c.b16 %v757, %v757
      %v760 = vpack.c.b16 %v758, %v758
      %v762 = vpack.i.b16 %v759, %v759
      %v764 = vlaneseq
      %v765 = vshrl.u32 %v764, 7
      %v766 = vsub.s32 0, %v765
      %v767 = vrot.slane %v762, %v766
      %v769 = vpack.i.b16 %v760, %v760
      %v771 = vlaneseq
      %v772 = vshrl.u32 %v771, 7
      %v773 = vsub.s32 0, %v772
      %v774 = vrot.slane %v769, %v773
      %777 = vrot.lane.b32.xlu0 %v767, 34
      %v778 = vpop.permute.xlu0 %777
      %779 = vrot.lane.b32.xlu0 %v774, 34
      %v780 = vpop.permute.xlu0 %779
      %vm781 = vcmask 277504
      %v782 = vsel %vm781, %v778, %v780
      %v786 = vmul.bf16 %v515, %v778
      %v787 = vmul.bf16 %v510, %v782
      %v788 = vmul.bf16 %v518, %v780
      %v792 = vrot.slane %v567, 6
      %v793 = vrot.slane %v568, 6
      %v794 = vrot.slane %v569, 6
      %795 = vrot.lane.b32.xlu0 %v792, 127
      %v796 = vpop.permute.xlu0 %795
      %797 = vrot.lane.b32.xlu0 %v793, 127
      %v798 = vpop.permute.xlu0 %797
      %799 = vrot.lane.b32.xlu0 %v794, 127
      %v800 = vpop.permute.xlu0 %799
      %vm801 = vcmask 1039360
      %v802 = vsel %vm801, %v796, %v798
      %v803 = vsel %vm801, %v798, %v800
      %v807 = vrot.slane %v601, 4
      %v808 = vrot.slane %v602, 4
      %v809 = vrot.slane %v603, 4
      %810 = vrot.lane.b32.xlu0 %v807, 126
      %v811 = vpop.permute.xlu0 %810
      %812 = vrot.lane.b32.xlu0 %v808, 126
      %v813 = vpop.permute.xlu0 %812
      %814 = vrot.lane.b32.xlu0 %v809, 126
      %v815 = vpop.permute.xlu0 %814
      %vm816 = vcmask 1031168
      %v817 = vsel %vm816, %v811, %v813
      %v818 = vsel %vm816, %v813, %v815
      %v822 = vrot.slane %v629, 2
      %v823 = vrot.slane %v630, 2
      %v824 = vrot.slane %v631, 2
      %825 = vrot.lane.b32.xlu0 %v822, 112
      %v826 = vpop.permute.xlu0 %825
      %827 = vrot.lane.b32.xlu0 %v823, 112
      %v828 = vpop.permute.xlu0 %827
      %829 = vrot.lane.b32.xlu0 %v824, 112
      %v830 = vpop.permute.xlu0 %829
      %vm831 = vcmask 916480
      %v832 = vsel %vm831, %v826, %v828
      %v833 = vsel %vm831, %v828, %v830
      %837 = vrot.lane.b32.xlu0 %v662, 111
      %v838 = vpop.permute.xlu0 %837
      %839 = vrot.lane.b32.xlu0 %v663, 111
      %v840 = vpop.permute.xlu0 %839
      %841 = vrot.lane.b32.xlu0 %v664, 111
      %v842 = vpop.permute.xlu0 %841
      %vm843 = vcmask 908288
      %v844 = vsel %vm843, %v838, %v840
      %v845 = vsel %vm843, %v840, %v842
      %v849 = vrot.slane %v690, 6
      %v850 = vrot.slane %v691, 6
      %v851 = vrot.slane %v692, 6
      %852 = vrot.lane.b32.xlu0 %v849, 110
      %v853 = vpop.permute.xlu0 %852
      %854 = vrot.lane.b32.xlu0 %v850, 110
      %v855 = vpop.permute.xlu0 %854
      %856 = vrot.lane.b32.xlu0 %v851, 110
      %v857 = vpop.permute.xlu0 %856
      %vm858 = vcmask 900096
      %v859 = vsel %vm858, %v853, %v855
      %v860 = vsel %vm858, %v855, %v857
      %v864 = vrot.slane %v724, 4
      %v865 = vrot.slane %v725, 4
      %v866 = vrot.slane %v726, 4
      %867 = vrot.lane.b32.xlu0 %v864, 96
      %v868 = vpop.permute.xlu0 %867
      %869 = vrot.lane.b32.xlu0 %v865, 96
      %v870 = vpop.permute.xlu0 %869
      %871 = vrot.lane.b32.xlu0 %v866, 96
      %v872 = vpop.permute.xlu0 %871
      %vm873 = vcmask 785408
      %v874 = vsel %vm873, %v868, %v870
      %v875 = vsel %vm873, %v870, %v872
      %v879 = vrot.slane %v752, 2
      %v880 = vrot.slane %v753, 2
      %v881 = vrot.slane %v754, 2
      %882 = vrot.lane.b32.xlu0 %v879, 95
      %v883 = vpop.permute.xlu0 %882
      %884 = vrot.lane.b32.xlu0 %v880, 95
      %v885 = vpop.permute.xlu0 %884
      %886 = vrot.lane.b32.xlu0 %v881, 95
      %v887 = vpop.permute.xlu0 %886
      %vm888 = vcmask 777216
      %v889 = vsel %vm888, %v883, %v885
      %v890 = vsel %vm888, %v885, %v887
      %894 = vrot.lane.b32.xlu0 %v786, 94
      %v895 = vpop.permute.xlu0 %894
      %896 = vrot.lane.b32.xlu0 %v787, 94
      %v897 = vpop.permute.xlu0 %896
      %898 = vrot.lane.b32.xlu0 %v788, 94
      %v899 = vpop.permute.xlu0 %898
      %vm900 = vcmask 769024
      %v901 = vsel %vm900, %v895, %v897
      %v902 = vsel %vm900, %v897, %v899
      %vm903 = vcmask 1041408
      %v906 = vsel %vm903, %v540, %v802
      %v909 = vsel %vm903, %v541, %v803
      %vm910 = vcmask 1043456
      %v912 = vsel %vm910, %v906, %v817
      %v914 = vsel %vm910, %v909, %v818
      %vm915 = vcmask 1045504
      %v917 = vsel %vm915, %v912, %v832
      %v920 = vsel %vm915, %v914, %v833
      %v924 = vsel %vm903, %v844, %v859
      %v927 = vsel %vm903, %v845, %v860
      %v929 = vsel %vm910, %v924, %v874
      %v931 = vsel %vm910, %v927, %v875
      %v933 = vsel %vm915, %v929, %v889
      %v936 = vsel %vm915, %v931, %v890
      %v938 = vld [vmem:[%s5] sm:$0xf]
      %940 = vset.pattern.permute.xlu0 0
      %941 = vperm.xlu0 %940, %v938
      %v942 = vpop.permute.xlu0 %941
      %vm944 = vcmask 293888
      %v946 = vsel %vm944, %v502, 0
      %v949 = vsel %vm903, %v901, 0
      %v952 = vsel %vm903, %v902, 0
      %954 = vmatprep.subr.bf16.mxu0 %v920
      %955 = vmatpush1.bf16.msra.mxu0 %v917
      %956 = vmatprep.subr.bf16.mxu0 %v936
      %957 = vmatpush1.bf16.msra.mxu0 %v933
      %958 = vmatprep.subr.bf16.mxu0 %v952
      %959 = vmatpush1.bf16.msra.mxu0 %v949
      %960 = vmatprep.subr.bf16.mxu0 0
      %961 = vmatpush1.bf16.msra.mxu0 0
      %962 = vmatprep.subr.bf16.mxu0 0
      %963 = vmatpush1.bf16.msra.mxu0 0
      %964 = vmatprep.subr.bf16.mxu0 0
      %965 = vmatpush1.bf16.msra.mxu0 0
      %966 = vmatprep.subr.bf16.mxu0 0
      %967 = vmatpush1.bf16.msra.mxu0 0
      %968 = vmatprep.subr.bf16.mxu0 0
      %969 = vmatpush1.bf16.msra.mxu0 0
      %970 = vmatprep.subr.bf16.mxu0 0
      %971 = vmatpush1.bf16.msra.mxu0 0
      %972 = vmatprep.subr.bf16.mxu0 0
      %973 = vmatpush1.bf16.msra.mxu0 0
      %974 = vmatprep.subr.bf16.mxu0 0
      %975 = vmatpush1.bf16.msra.mxu0 0
      %976 = vmatprep.subr.bf16.mxu0 0
      %977 = vmatpush1.bf16.msra.mxu0 0
      %978 = vmatprep.subr.bf16.mxu0 0
      %979 = vmatpush1.bf16.msra.mxu0 0
      %980 = vmatprep.subr.bf16.mxu0 0
      %981 = vmatpush1.bf16.msra.mxu0 0
      %982 = vmatprep.subr.bf16.mxu0 0
      %983 = vmatpush1.bf16.msra.mxu0 0
      %984 = vmatprep.subr.bf16.mxu0 0
      %985 = vmatpush1.bf16.msra.mxu0 0
      %986 = vmatprep.mubr.bf16.mxu0 0
      %987 = vmatmul.mubr.bf16.gmra.mrb[0].mxu0 %v946
      %v988 = vpop.f32.mrb[0].mxu0
      %v989 = vadd.f32 %v942, %v988
      %v990 = vpop.f32.mrb[0].mxu0
      %v991 = vadd.f32 %v942, %v990
      %v992 = vpop.f32.mrb[0].mxu0
      %v993 = vpop.f32.mrb[0].mxu0
      %994 = vdwg.mxu0
      %v995 = vld [vmem:[%s398] sm:$0xff]
      %v997 = vcombine.high %v995, %v995
      %v999 = vpack.c.bf16 %v995, %v995
      %v1000 = vpack.c.bf16 %v997, %v997
      %v1001 = vld [vmem:[%s6] sm:$0x3]
      %1004 = vrot.lane.b32.xlu0 %v999, 17
      %v1005 = vpop.permute.xlu0 %1004
      %1006 = vrot.lane.b32.xlu0 %v1000, 17
      %v1007 = vpop.permute.xlu0 %1006
      %v1008 = vsel %vm509, %v1005, %v1007
      %v1011 = vsel %vm512, 0, %v1005
      %v1014 = vsel %vm512, %v1007, 0
      %v1016 = vmul.bf16 %v1011, %v532
      %v1017 = vmul.bf16 %v1008, %v539
      %v1018 = vmul.bf16 %v1011, %v559
      %v1019 = vmul.bf16 %v1008, %v563
      %v1020 = vmul.bf16 %v1014, %v561
      %v1021 = vmul.bf16 %v1011, %v593
      %v1022 = vmul.bf16 %v1008, %v597
      %v1023 = vmul.bf16 %v1014, %v595
      %v1024 = vmul.bf16 %v1011, %v621
      %v1025 = vmul.bf16 %v1008, %v625
      %v1026 = vmul.bf16 %v1014, %v623
      %v1027 = vmul.bf16 %v1011, %v655
      %v1028 = vmul.bf16 %v1008, %v658
      %v1029 = vmul.bf16 %v1014, %v657
      %v1030 = vmul.bf16 %v1011, %v682
      %v1031 = vmul.bf16 %v1008, %v686
      %v1032 = vmul.bf16 %v1014, %v684
      %v1033 = vmul.bf16 %v1011, %v716
      %v1034 = vmul.bf16 %v1008, %v720
      %v1035 = vmul.bf16 %v1014, %v718
      %v1036 = vmul.bf16 %v1011, %v744
      %v1037 = vmul.bf16 %v1008, %v748
      %v1038 = vmul.bf16 %v1014, %v746
      %v1039 = vmul.bf16 %v1011, %v778
      %v1040 = vmul.bf16 %v1008, %v782
      %v1041 = vmul.bf16 %v1014, %v780
      %v1045 = vrot.slane %v1018, 6
      %v1046 = vrot.slane %v1019, 6
      %v1047 = vrot.slane %v1020, 6
      %1048 = vrot.lane.b32.xlu0 %v1045, 127
      %v1049 = vpop.permute.xlu0 %1048
      %1050 = vrot.lane.b32.xlu0 %v1046, 127
      %v1051 = vpop.permute.xlu0 %1050
      %1052 = vrot.lane.b32.xlu0 %v1047, 127
      %v1053 = vpop.permute.xlu0 %1052
      %v1054 = vsel %vm801, %v1049, %v1051
      %v1055 = vsel %vm801, %v1051, %v1053
      %v1059 = vrot.slane %v1021, 4
      %v1060 = vrot.slane %v1022, 4
      %v1061 = vrot.slane %v1023, 4
      %1062 = vrot.lane.b32.xlu0 %v1059, 126
      %v1063 = vpop.permute.xlu0 %1062
      %1064 = vrot.lane.b32.xlu0 %v1060, 126
      %v1065 = vpop.permute.xlu0 %1064
      %1066 = vrot.lane.b32.xlu0 %v1061, 126
      %v1067 = vpop.permute.xlu0 %1066
      %v1068 = vsel %vm816, %v1063, %v1065
      %v1069 = vsel %vm816, %v1065, %v1067
      %v1073 = vrot.slane %v1024, 2
      %v1074 = vrot.slane %v1025, 2
      %v1075 = vrot.slane %v1026, 2
      %1076 = vrot.lane.b32.xlu0 %v1073, 112
      %v1077 = vpop.permute.xlu0 %1076
      %1078 = vrot.lane.b32.xlu0 %v1074, 112
      %v1079 = vpop.permute.xlu0 %1078
      %1080 = vrot.lane.b32.xlu0 %v1075, 112
      %v1081 = vpop.permute.xlu0 %1080
      %v1082 = vsel %vm831, %v1077, %v1079
      %v1083 = vsel %vm831, %v1079, %v1081
      %1087 = vrot.lane.b32.xlu0 %v1027, 111
      %v1088 = vpop.permute.xlu0 %1087
      %1089 = vrot.lane.b32.xlu0 %v1028, 111
      %v1090 = vpop.permute.xlu0 %1089
      %1091 = vrot.lane.b32.xlu0 %v1029, 111
      %v1092 = vpop.permute.xlu0 %1091
      %v1093 = vsel %vm843, %v1088, %v1090
      %v1094 = vsel %vm843, %v1090, %v1092
      %v1098 = vrot.slane %v1030, 6
      %v1099 = vrot.slane %v1031, 6
      %v1100 = vrot.slane %v1032, 6
      %1101 = vrot.lane.b32.xlu0 %v1098, 110
      %v1102 = vpop.permute.xlu0 %1101
      %1103 = vrot.lane.b32.xlu0 %v1099, 110
      %v1104 = vpop.permute.xlu0 %1103
      %1105 = vrot.lane.b32.xlu0 %v1100, 110
      %v1106 = vpop.permute.xlu0 %1105
      %v1107 = vsel %vm858, %v1102, %v1104
      %v1108 = vsel %vm858, %v1104, %v1106
      %v1112 = vrot.slane %v1033, 4
      %v1113 = vrot.slane %v1034, 4
      %v1114 = vrot.slane %v1035, 4
      %1115 = vrot.lane.b32.xlu0 %v1112, 96
      %v1116 = vpop.permute.xlu0 %1115
      %1117 = vrot.lane.b32.xlu0 %v1113, 96
      %v1118 = vpop.permute.xlu0 %1117
      %1119 = vrot.lane.b32.xlu0 %v1114, 96
      %v1120 = vpop.permute.xlu0 %1119
      %v1121 = vsel %vm873, %v1116, %v1118
      %v1122 = vsel %vm873, %v1118, %v1120
      %v1126 = vrot.slane %v1036, 2
      %v1127 = vrot.slane %v1037, 2
      %v1128 = vrot.slane %v1038, 2
      %1129 = vrot.lane.b32.xlu0 %v1126, 95
      %v1130 = vpop.permute.xlu0 %1129
      %1131 = vrot.lane.b32.xlu0 %v1127, 95
      %v1132 = vpop.permute.xlu0 %1131
      %1133 = vrot.lane.b32.xlu0 %v1128, 95
      %v1134 = vpop.permute.xlu0 %1133
      %v1135 = vsel %vm888, %v1130, %v1132
      %v1136 = vsel %vm888, %v1132, %v1134
      %1140 = vrot.lane.b32.xlu0 %v1039, 94
      %v1141 = vpop.permute.xlu0 %1140
      %1142 = vrot.lane.b32.xlu0 %v1040, 94
      %v1143 = vpop.permute.xlu0 %1142
      %1144 = vrot.lane.b32.xlu0 %v1041, 94
      %v1145 = vpop.permute.xlu0 %1144
      %v1146 = vsel %vm900, %v1141, %v1143
      %v1147 = vsel %vm900, %v1143, %v1145
      %v1150 = vsel %vm903, %v1016, %v1054
      %v1153 = vsel %vm903, %v1017, %v1055
      %v1155 = vsel %vm910, %v1150, %v1068
      %v1157 = vsel %vm910, %v1153, %v1069
      %v1159 = vsel %vm915, %v1155, %v1082
      %v1162 = vsel %vm915, %v1157, %v1083
      %v1166 = vsel %vm903, %v1093, %v1107
      %v1169 = vsel %vm903, %v1094, %v1108
      %v1171 = vsel %vm910, %v1166, %v1121
      %v1173 = vsel %vm910, %v1169, %v1122
      %v1175 = vsel %vm915, %v1171, %v1135
      %v1178 = vsel %vm915, %v1173, %v1136
      %v1180 = vpack.c.bf16 %v989, %v989
      %v1181 = vpack.c.bf16 %v991, %v991
      %v1182 = vld [vmem:[%s7] sm:$0x3]
      %1185 = vrot.lane.b32.xlu0 %v1180, 17
      %v1186 = vpop.permute.xlu0 %1185
      %1187 = vrot.lane.b32.xlu0 %v1181, 17
      %v1188 = vpop.permute.xlu0 %1187
      %v1189 = vsel %vm509, %v1186, %v1188
      %v1192 = vsel %vm512, 0, %v1186
      %v1195 = vsel %vm512, %v1188, 0
      %v1197 = vmul.bf16 %v1192, %v532
      %v1198 = vmul.bf16 %v1189, %v539
      %v1199 = vmul.bf16 %v1192, %v559
      %v1200 = vmul.bf16 %v1189, %v563
      %v1201 = vmul.bf16 %v1195, %v561
      %v1202 = vmul.bf16 %v1192, %v593
      %v1203 = vmul.bf16 %v1189, %v597
      %v1204 = vmul.bf16 %v1195, %v595
      %v1205 = vmul.bf16 %v1192, %v621
      %v1206 = vmul.bf16 %v1189, %v625
      %v1207 = vmul.bf16 %v1195, %v623
      %v1208 = vmul.bf16 %v1192, %v655
      %v1209 = vmul.bf16 %v1189, %v658
      %v1210 = vmul.bf16 %v1195, %v657
      %v1211 = vmul.bf16 %v1192, %v682
      %v1212 = vmul.bf16 %v1189, %v686
      %v1213 = vmul.bf16 %v1195, %v684
      %v1214 = vmul.bf16 %v1192, %v716
      %v1215 = vmul.bf16 %v1189, %v720
      %v1216 = vmul.bf16 %v1195, %v718
      %v1217 = vmul.bf16 %v1192, %v744
      %v1218 = vmul.bf16 %v1189, %v748
      %v1219 = vmul.bf16 %v1195, %v746
      %v1220 = vmul.bf16 %v1192, %v778
      %v1221 = vmul.bf16 %v1189, %v782
      %v1222 = vmul.bf16 %v1195, %v780
      %v1226 = vrot.slane %v1199, 6
      %v1227 = vrot.slane %v1200, 6
      %v1228 = vrot.slane %v1201, 6
      %1229 = vrot.lane.b32.xlu0 %v1226, 127
      %v1230 = vpop.permute.xlu0 %1229
      %1231 = vrot.lane.b32.xlu0 %v1227, 127
      %v1232 = vpop.permute.xlu0 %1231
      %1233 = vrot.lane.b32.xlu0 %v1228, 127
      %v1234 = vpop.permute.xlu0 %1233
      %v1235 = vsel %vm801, %v1230, %v1232
      %v1236 = vsel %vm801, %v1232, %v1234
      %v1240 = vrot.slane %v1202, 4
      %v1241 = vrot.slane %v1203, 4
      %v1242 = vrot.slane %v1204, 4
      %1243 = vrot.lane.b32.xlu0 %v1240, 126
      %v1244 = vpop.permute.xlu0 %1243
      %1245 = vrot.lane.b32.xlu0 %v1241, 126
      %v1246 = vpop.permute.xlu0 %1245
      %1247 = vrot.lane.b32.xlu0 %v1242, 126
      %v1248 = vpop.permute.xlu0 %1247
      %v1249 = vsel %vm816, %v1244, %v1246
      %v1250 = vsel %vm816, %v1246, %v1248
      %v1254 = vrot.slane %v1205, 2
      %v1255 = vrot.slane %v1206, 2
      %v1256 = vrot.slane %v1207, 2
      %1257 = vrot.lane.b32.xlu0 %v1254, 112
      %v1258 = vpop.permute.xlu0 %1257
      %1259 = vrot.lane.b32.xlu0 %v1255, 112
      %v1260 = vpop.permute.xlu0 %1259
      %1261 = vrot.lane.b32.xlu0 %v1256, 112
      %v1262 = vpop.permute.xlu0 %1261
      %v1263 = vsel %vm831, %v1258, %v1260
      %v1264 = vsel %vm831, %v1260, %v1262
      %1268 = vrot.lane.b32.xlu0 %v1208, 111
      %v1269 = vpop.permute.xlu0 %1268
      %1270 = vrot.lane.b32.xlu0 %v1209, 111
      %v1271 = vpop.permute.xlu0 %1270
      %1272 = vrot.lane.b32.xlu0 %v1210, 111
      %v1273 = vpop.permute.xlu0 %1272
      %v1274 = vsel %vm843, %v1269, %v1271
      %v1275 = vsel %vm843, %v1271, %v1273
      %v1279 = vrot.slane %v1211, 6
      %v1280 = vrot.slane %v1212, 6
      %v1281 = vrot.slane %v1213, 6
      %1282 = vrot.lane.b32.xlu0 %v1279, 110
      %v1283 = vpop.permute.xlu0 %1282
      %1284 = vrot.lane.b32.xlu0 %v1280, 110
      %v1285 = vpop.permute.xlu0 %1284
      %1286 = vrot.lane.b32.xlu0 %v1281, 110
      %v1287 = vpop.permute.xlu0 %1286
      %v1288 = vsel %vm858, %v1283, %v1285
      %v1289 = vsel %vm858, %v1285, %v1287
      %v1293 = vrot.slane %v1214, 4
      %v1294 = vrot.slane %v1215, 4
      %v1295 = vrot.slane %v1216, 4
      %1296 = vrot.lane.b32.xlu0 %v1293, 96
      %v1297 = vpop.permute.xlu0 %1296
      %1298 = vrot.lane.b32.xlu0 %v1294, 96
      %v1299 = vpop.permute.xlu0 %1298
      %1300 = vrot.lane.b32.xlu0 %v1295, 96
      %v1301 = vpop.permute.xlu0 %1300
      %v1302 = vsel %vm873, %v1297, %v1299
      %v1303 = vsel %vm873, %v1299, %v1301
      %v1307 = vrot.slane %v1217, 2
      %v1308 = vrot.slane %v1218, 2
      %v1309 = vrot.slane %v1219, 2
      %1310 = vrot.lane.b32.xlu0 %v1307, 95
      %v1311 = vpop.permute.xlu0 %1310
      %1312 = vrot.lane.b32.xlu0 %v1308, 95
      %v1313 = vpop.permute.xlu0 %1312
      %1314 = vrot.lane.b32.xlu0 %v1309, 95
      %v1315 = vpop.permute.xlu0 %1314
      %v1316 = vsel %vm888, %v1311, %v1313
      %v1317 = vsel %vm888, %v1313, %v1315
      %1321 = vrot.lane.b32.xlu0 %v1220, 94
      %v1322 = vpop.permute.xlu0 %1321
      %1323 = vrot.lane.b32.xlu0 %v1221, 94
      %v1324 = vpop.permute.xlu0 %1323
      %1325 = vrot.lane.b32.xlu0 %v1222, 94
      %v1326 = vpop.permute.xlu0 %1325
      %v1327 = vsel %vm900, %v1322, %v1324
      %v1328 = vsel %vm900, %v1324, %v1326
      %v1331 = vsel %vm903, %v1197, %v1235
      %v1334 = vsel %vm903, %v1198, %v1236
      %v1336 = vsel %vm910, %v1331, %v1249
      %v1338 = vsel %vm910, %v1334, %v1250
      %v1340 = vsel %vm915, %v1336, %v1263
      %v1343 = vsel %vm915, %v1338, %v1264
      %v1347 = vsel %vm903, %v1274, %v1288
      %v1350 = vsel %vm903, %v1275, %v1289
      %v1352 = vsel %vm910, %v1347, %v1302
      %v1354 = vsel %vm910, %v1350, %v1303
      %v1356 = vsel %vm915, %v1352, %v1316
      %v1359 = vsel %vm915, %v1354, %v1317
      %v1362 = vsel %vm944, %v1182, 0
      %v1365 = vsel %vm903, %v1327, 0
      %v1368 = vsel %vm903, %v1328, 0
      %1370 = vmatprep.subr.bf16.mxu0 %v1343
      %1371 = vmatpush1.bf16.msra.mxu0 %v1340
      %1372 = vmatprep.subr.bf16.mxu0 %v1359
      %1373 = vmatpush1.bf16.msra.mxu0 %v1356
      %1374 = vmatprep.subr.bf16.mxu0 %v1368
      %1375 = vmatpush1.bf16.msra.mxu0 %v1365
      %1376 = vmatprep.subr.bf16.mxu0 0
      %1377 = vmatpush1.bf16.msra.mxu0 0
      %1378 = vmatprep.subr.bf16.mxu0 0
      %1379 = vmatpush1.bf16.msra.mxu0 0
      %1380 = vmatprep.subr.bf16.mxu0 0
      %1381 = vmatpush1.bf16.msra.mxu0 0
      %1382 = vmatprep.subr.bf16.mxu0 0
      %1383 = vmatpush1.bf16.msra.mxu0 0
      %1384 = vmatprep.subr.bf16.mxu0 0
      %1385 = vmatpush1.bf16.msra.mxu0 0
      %1386 = vmatprep.subr.bf16.mxu0 0
      %1387 = vmatpush1.bf16.msra.mxu0 0
      %1388 = vmatprep.subr.bf16.mxu0 0
      %1389 = vmatpush1.bf16.msra.mxu0 0
      %1390 = vmatprep.subr.bf16.mxu0 0
      %1391 = vmatpush1.bf16.msra.mxu0 0
      %1392 = vmatprep.subr.bf16.mxu0 0
      %1393 = vmatpush1.bf16.msra.mxu0 0
      %1394 = vmatprep.subr.bf16.mxu0 0
      %1395 = vmatpush1.bf16.msra.mxu0 0
      %1396 = vmatprep.subr.bf16.mxu0 0
      %1397 = vmatpush1.bf16.msra.mxu0 0
      %1398 = vmatprep.subr.bf16.mxu0 0
      %1399 = vmatpush1.bf16.msra.mxu0 0
      %1400 = vmatprep.subr.bf16.mxu0 0
      %1401 = vmatpush1.bf16.msra.mxu0 0
      %1402 = vmatprep.mubr.bf16.mxu0 0
      %1403 = vmatmul.mubr.bf16.gmra.mrb[0].mxu0 %v1362
      %v1404 = vpop.f32.mrb[0].mxu0
      %v1405 = vadd.f32 0.0, %v1404
      %v1406 = vpop.f32.mrb[0].mxu0
      %v1407 = vadd.f32 0.0, %v1406
      %v1408 = vpop.f32.mrb[0].mxu0
      %v1409 = vpop.f32.mrb[0].mxu0
      %1410 = vdwg.mxu0
      %v1412 = vsel %vm944, %v1001, 0
      %v1415 = vsel %vm903, %v1146, 0
      %v1418 = vsel %vm903, %v1147, 0
      %1420 = vmatprep.subr.bf16.mxu0 %v1162
      %1421 = vmatpush1.bf16.msra.mxu0 %v1159
      %1422 = vmatprep.subr.bf16.mxu0 %v1178
      %1423 = vmatpush1.bf16.msra.mxu0 %v1175
      %1424 = vmatprep.subr.bf16.mxu0 %v1418
      %1425 = vmatpush1.bf16.msra.mxu0 %v1415
      %1426 = vmatprep.subr.bf16.mxu0 0
      %1427 = vmatpush1.bf16.msra.mxu0 0
      %1428 = vmatprep.subr.bf16.mxu0 0
      %1429 = vmatpush1.bf16.msra.mxu0 0
      %1430 = vmatprep.subr.bf16.mxu0 0
      %1431 = vmatpush1.bf16.msra.mxu0 0
      %1432 = vmatprep.subr.bf16.mxu0 0
      %1433 = vmatpush1.bf16.msra.mxu0 0
      %1434 = vmatprep.subr.bf16.mxu0 0
      %1435 = vmatpush1.bf16.msra.mxu0 0
      %1436 = vmatprep.subr.bf16.mxu0 0
      %1437 = vmatpush1.bf16.msra.mxu0 0
      %1438 = vmatprep.subr.bf16.mxu0 0
      %1439 = vmatpush1.bf16.msra.mxu0 0
      %1440 = vmatprep.subr.bf16.mxu0 0
      %1441 = vmatpush1.bf16.msra.mxu0 0
      %1442 = vmatprep.subr.bf16.mxu0 0
      %1443 = vmatpush1.bf16.msra.mxu0 0
      %1444 = vmatprep.subr.bf16.mxu0 0
      %1445 = vmatpush1.bf16.msra.mxu0 0
      %1446 = vmatprep.subr.bf16.mxu0 0
      %1447 = vmatpush1.bf16.msra.mxu0 0
      %1448 = vmatprep.subr.bf16.mxu0 0
      %1449 = vmatpush1.bf16.msra.mxu0 0
      %1450 = vmatprep.subr.bf16.mxu0 0
      %1451 = vmatpush1.bf16.msra.mxu0 0
      %1452 = vmatprep.mubr.bf16.mxu0 0
      %1453 = vmatmul.mubr.bf16.gmra.mrb[0].mxu0 %v1412
      %v1454 = vpop.f32.mrb[0].mxu0
      %v1455 = vadd.f32 %v1405, %v1454
      %v1456 = vpop.f32.mrb[0].mxu0
      %v1457 = vadd.f32 %v1407, %v1456
      %v1458 = vpop.f32.mrb[0].mxu0
      %v1459 = vpop.f32.mrb[0].mxu0
      %1460 = vdwg.mxu0
      %v1461 = vld [vmem:[%s8] sm:$0xf]
      %1463 = vset.pattern.permute.xlu0 0
      %1464 = vperm.xlu0 %1463, %v1461
      %v1465 = vpop.permute.xlu0 %1464
      %v1467 = vadd.f32 %v1455, %v1465
      %v1468 = vadd.f32 %v1457, %v1465
      %v1469 = vmax.f32 %v1467, 0.0
      %v1470 = vmax.f32 %v1468, 0.0
      %v1471 = vpack.c.bf16 %v1469, %v1469
      %v1472 = vpack.c.bf16 %v1470, %v1470
      %v1473 = vld [vmem:[%s9] sm:$0x3]
      %1476 = vrot.lane.b32.xlu0 %v1471, 17
      %v1477 = vpop.permute.xlu0 %1476
      %1478 = vrot.lane.b32.xlu0 %v1472, 17
      %v1479 = vpop.permute.xlu0 %1478
      %v1480 = vsel %vm509, %v1477, %v1479
      %v1483 = vsel %vm512, 0, %v1477
      %v1486 = vsel %vm512, %v1479, 0
      %v1488 = vmul.bf16 %v1483, %v532
      %v1489 = vmul.bf16 %v1480, %v539
      %v1490 = vmul.bf16 %v1483, %v559
      %v1491 = vmul.bf16 %v1480, %v563
      %v1492 = vmul.bf16 %v1486, %v561
      %v1493 = vmul.bf16 %v1483, %v593
      %v1494 = vmul.bf16 %v1480, %v597
      %v1495 = vmul.bf16 %v1486, %v595
      %v1496 = vmul.bf16 %v1483, %v621
      %v1497 = vmul.bf16 %v1480, %v625
      %v1498 = vmul.bf16 %v1486, %v623
      %v1499 = vmul.bf16 %v1483, %v655
      %v1500 = vmul.bf16 %v1480, %v658
      %v1501 = vmul.bf16 %v1486, %v657
      %v1502 = vmul.bf16 %v1483, %v682
      %v1503 = vmul.bf16 %v1480, %v686
      %v1504 = vmul.bf16 %v1486, %v684
      %v1505 = vmul.bf16 %v1483, %v716
      %v1506 = vmul.bf16 %v1480, %v720
      %v1507 = vmul.bf16 %v1486, %v718
      %v1508 = vmul.bf16 %v1483, %v744
      %v1509 = vmul.bf16 %v1480, %v748
      %v1510 = vmul.bf16 %v1486, %v746
      %v1511 = vmul.bf16 %v1483, %v778
      %v1512 = vmul.bf16 %v1480, %v782
      %v1513 = vmul.bf16 %v1486, %v780
      %v1517 = vrot.slane %v1490, 6
      %v1518 = vrot.slane %v1491, 6
      %v1519 = vrot.slane %v1492, 6
      %1520 = vrot.lane.b32.xlu0 %v1517, 127
      %v1521 = vpop.permute.xlu0 %1520
      %1522 = vrot.lane.b32.xlu0 %v1518, 127
      %v1523 = vpop.permute.xlu0 %1522
      %1524 = vrot.lane.b32.xlu0 %v1519, 127
      %v1525 = vpop.permute.xlu0 %1524
      %v1526 = vsel %vm801, %v1521, %v1523
      %v1527 = vsel %vm801, %v1523, %v1525
      %v1531 = vrot.slane %v1493, 4
      %v1532 = vrot.slane %v1494, 4
      %v1533 = vrot.slane %v1495, 4
      %1534 = vrot.lane.b32.xlu0 %v1531, 126
      %v1535 = vpop.permute.xlu0 %1534
      %1536 = vrot.lane.b32.xlu0 %v1532, 126
      %v1537 = vpop.permute.xlu0 %1536
      %1538 = vrot.lane.b32.xlu0 %v1533, 126
      %v1539 = vpop.permute.xlu0 %1538
      %v1540 = vsel %vm816, %v1535, %v1537
      %v1541 = vsel %vm816, %v1537, %v1539
      %v1545 = vrot.slane %v1496, 2
      %v1546 = vrot.slane %v1497, 2
      %v1547 = vrot.slane %v1498, 2
      %1548 = vrot.lane.b32.xlu0 %v1545, 112
      %v1549 = vpop.permute.xlu0 %1548
      %1550 = vrot.lane.b32.xlu0 %v1546, 112
      %v1551 = vpop.permute.xlu0 %1550
      %1552 = vrot.lane.b32.xlu0 %v1547, 112
      %v1553 = vpop.permute.xlu0 %1552
      %v1554 = vsel %vm831, %v1549, %v1551
      %v1555 = vsel %vm831, %v1551, %v1553
      %1559 = vrot.lane.b32.xlu0 %v1499, 111
      %v1560 = vpop.permute.xlu0 %1559
      %1561 = vrot.lane.b32.xlu0 %v1500, 111
      %v1562 = vpop.permute.xlu0 %1561
      %1563 = vrot.lane.b32.xlu0 %v1501, 111
      %v1564 = vpop.permute.xlu0 %1563
      %v1565 = vsel %vm843, %v1560, %v1562
      %v1566 = vsel %vm843, %v1562, %v1564
      %v1570 = vrot.slane %v1502, 6
      %v1571 = vrot.slane %v1503, 6
      %v1572 = vrot.slane %v1504, 6
      %1573 = vrot.lane.b32.xlu0 %v1570, 110
      %v1574 = vpop.permute.xlu0 %1573
      %1575 = vrot.lane.b32.xlu0 %v1571, 110
      %v1576 = vpop.permute.xlu0 %1575
      %1577 = vrot.lane.b32.xlu0 %v1572, 110
      %v1578 = vpop.permute.xlu0 %1577
      %v1579 = vsel %vm858, %v1574, %v1576
      %v1580 = vsel %vm858, %v1576, %v1578
      %v1584 = vrot.slane %v1505, 4
      %v1585 = vrot.slane %v1506, 4
      %v1586 = vrot.slane %v1507, 4
      %1587 = vrot.lane.b32.xlu0 %v1584, 96
      %v1588 = vpop.permute.xlu0 %1587
      %1589 = vrot.lane.b32.xlu0 %v1585, 96
      %v1590 = vpop.permute.xlu0 %1589
      %1591 = vrot.lane.b32.xlu0 %v1586, 96
      %v1592 = vpop.permute.xlu0 %1591
      %v1593 = vsel %vm873, %v1588, %v1590
      %v1594 = vsel %vm873, %v1590, %v1592
      %v1598 = vrot.slane %v1508, 2
      %v1599 = vrot.slane %v1509, 2
      %v1600 = vrot.slane %v1510, 2
      %1601 = vrot.lane.b32.xlu0 %v1598, 95
      %v1602 = vpop.permute.xlu0 %1601
      %1603 = vrot.lane.b32.xlu0 %v1599, 95
      %v1604 = vpop.permute.xlu0 %1603
      %1605 = vrot.lane.b32.xlu0 %v1600, 95
      %v1606 = vpop.permute.xlu0 %1605
      %v1607 = vsel %vm888, %v1602, %v1604
      %v1608 = vsel %vm888, %v1604, %v1606
      %1612 = vrot.lane.b32.xlu0 %v1511, 94
      %v1613 = vpop.permute.xlu0 %1612
      %1614 = vrot.lane.b32.xlu0 %v1512, 94
      %v1615 = vpop.permute.xlu0 %1614
      %1616 = vrot.lane.b32.xlu0 %v1513, 94
      %v1617 = vpop.permute.xlu0 %1616
      %v1618 = vsel %vm900, %v1613, %v1615
      %v1619 = vsel %vm900, %v1615, %v1617
      %v1622 = vsel %vm903, %v1488, %v1526
      %v1625 = vsel %vm903, %v1489, %v1527
      %v1627 = vsel %vm910, %v1622, %v1540
      %v1629 = vsel %vm910, %v1625, %v1541
      %v1631 = vsel %vm915, %v1627, %v1554
      %v1634 = vsel %vm915, %v1629, %v1555
      %v1638 = vsel %vm903, %v1565, %v1579
      %v1641 = vsel %vm903, %v1566, %v1580
      %v1643 = vsel %vm910, %v1638, %v1593
      %v1645 = vsel %vm910, %v1641, %v1594
      %v1647 = vsel %vm915, %v1643, %v1607
      %v1650 = vsel %vm915, %v1645, %v1608
      %v1652 = vld [vmem:[%s10] sm:$0xf]
      %1654 = vset.pattern.permute.xlu0 0
      %1655 = vperm.xlu0 %1654, %v1652
      %v1656 = vpop.permute.xlu0 %1655
      %v1659 = vsel %vm944, %v1473, 0
      %v1662 = vsel %vm903, %v1618, 0
      %v1665 = vsel %vm903, %v1619, 0
      %1667 = vmatprep.subr.bf16.mxu0 %v1634
      %1668 = vmatpush1.bf16.msra.mxu0 %v1631
      %1669 = vmatprep.subr.bf16.mxu0 %v1650
      %1670 = vmatpush1.bf16.msra.mxu0 %v1647
      %1671 = vmatprep.subr.bf16.mxu0 %v1665
      %1672 = vmatpush1.bf16.msra.mxu0 %v1662
      %1673 = vmatprep.subr.bf16.mxu0 0
      %1674 = vmatpush1.bf16.msra.mxu0 0
      %1675 = vmatprep.subr.bf16.mxu0 0
      %1676 = vmatpush1.bf16.msra.mxu0 0
      %1677 = vmatprep.subr.bf16.mxu0 0
      %1678 = vmatpush1.bf16.msra.mxu0 0
      %1679 = vmatprep.subr.bf16.mxu0 0
      %1680 = vmatpush1.bf16.msra.mxu0 0
      %1681 = vmatprep.subr.bf16.mxu0 0
      %1682 = vmatpush1.bf16.msra.mxu0 0
      %1683 = vmatprep.subr.bf16.mxu0 0
      %1684 = vmatpush1.bf16.msra.mxu0 0
      %1685 = vmatprep.subr.bf16.mxu0 0
      %1686 = vmatpush1.bf16.msra.mxu0 0
      %1687 = vmatprep.subr.bf16.mxu0 0
      %1688 = vmatpush1.bf16.msra.mxu0 0
      %1689 = vmatprep.subr.bf16.mxu0 0
      %1690 = vmatpush1.bf16.msra.mxu0 0
      %1691 = vmatprep.subr.bf16.mxu0 0
      %1692 = vmatpush1.bf16.msra.mxu0 0
      %1693 = vmatprep.subr.bf16.mxu0 0
      %1694 = vmatpush1.bf16.msra.mxu0 0
      %1695 = vmatprep.subr.bf16.mxu0 0
      %1696 = vmatpush1.bf16.msra.mxu0 0
      %1697 = vmatprep.subr.bf16.mxu0 0
      %1698 = vmatpush1.bf16.msra.mxu0 0
      %1699 = vmatprep.mubr.bf16.mxu0 0
      %1700 = vmatmul.mubr.bf16.gmra.mrb[0].mxu0 %v1659
      %v1701 = vpop.f32.mrb[0].mxu0
      %v1702 = vadd.f32 %v1656, %v1701
      %v1703 = vpop.f32.mrb[0].mxu0
      %v1704 = vadd.f32 %v1656, %v1703
      %v1705 = vpop.f32.mrb[0].mxu0
      %v1706 = vpop.f32.mrb[0].mxu0
      %1707 = vdwg.mxu0
      %v1708 = vmax.f32 %v1702, 0.0
      %v1709 = vmax.f32 %v1704, 0.0
      %v1712 = vcombine.low %v1708, %v1709
      %1714 = vst [vmem:[%s403] sm:$0xff] %v1712
      %p1715 = scmp.lt.s32.totalorder %s22, 1
      %s1716 = scalar_select %p1715, %s22, 1
      %s1717 = smul.addr %s1716, 2
      %s1718 = smul.addr %s1717, 4
      %s1719 = scalar_lea.vmem %s11, %s1718
      // Predicated region
      $region65: #{unet_up_forward.1} parent=63 // pred_check
        %p1720 = pneg %p281
      $region66: #{unet_up_forward.1} parent=63 // pred_check_branch
        %1722 = sbr.rel (%p1720) target = $region68
      $region67: #{unet_up_forward.1} parent=63 // pred_region
        _
      $region68: #{unet_up_forward.1} parent=63 // pred_fallthru
        _
    $region64: #{unet_up_forward.1} parent=5 // pred_fallthru
      _
    %p1723 = scmp.le.s32.totalorder 2, %s17
    // Predicated region
    $region69: #{unet_up_forward.1} parent=5 // pred_check
      %p1724 = pneg %p1723
    $region70: #{unet_up_forward.1} parent=5 // pred_check_branch
      %1726 = sbr.rel (%p1724) target = $region72
    $region71: #{unet_up_forward.1} parent=5 // pred_region
      %s1727 = ssub.s32 %s17, 2
      // Predicated region
      $region73: #{unet_up_forward.1} parent=71 // pred_check
        %p1728 = pneg %p287
      $region74: #{unet_up_forward.1} parent=71 // pred_check_branch
        %1730 = sbr.rel (%p1728) target = $region76
      $region75: #{unet_up_forward.1} parent=71 // pred_region
        %p1731 = scmp.lt.s32.totalorder %s23, 1
        %s1732 = scalar_select %p1731, %s23, 1
        %s1733 = smul.addr %s1732, 2
        %s1734 = smul.addr %s1733, 4
        %s1735 = scalar_lea.vmem %s11, %s1734
      $region76: #{unet_up_forward.1} parent=71 // pred_fallthru
        _
    $region72: #{unet_up_forward.1} parent=5 // pred_fallthru
      _
  $region6: #{unet_up_forward.1} parent=0 // loop_footer
    %s21 = sadd.s32 1, %s17
  $region7: #{unet_up_forward.1} parent=0 // loop_footer_branch
    %16 = sbr.rel target = $region3
  $region8: #{unet_up_forward.1} parent=0 // loop_exit
    _

</llo_original>
